<compile_context>
chip_gen: v7x
topology: tpu7x:2x2x1
jax: 0.10.0
libtpu: 0.0.40
codegen_flags: <defaults>
</compile_context>

<pallas_src>
import numpy as np
import jax
import jax.numpy as jnp
from jax.experimental import pallas as pl
from jax.experimental.pallas import tpu as pltpu


def fusion_kernel(x_ref, img_ref, wbc_ref, wd_ref, gamma_ref, out_ref):
    # x_ref / img_ref / out_ref : (1, C, H, W) VMEM blocks (one image)
    # wbc_ref : (2*C*H, C*H) VMEM  == kron(concat([wB, wC], 0), I_H)
    # wd_ref  : (C*H,   C*H) VMEM  == kron(wD, I_H)
    # gamma_ref : (1,) SMEM scalar
    _, C, H, W = x_ref.shape
    CH = C * H
    gamma = gamma_ref[0]

    x3 = x_ref[0].astype(jnp.float32)        # (C, H, W)
    img3 = img_ref[0].astype(jnp.float32)    # (C, H, W)

    # Layout-preserving leading-dim merges: (C, H, W) -> (C*H, W).
    x2 = x3.reshape(CH, W)
    img2 = img3.reshape(CH, W)

    # ---- convB / convC fused into one MXU matmul (channel mixing) ----
    bc2 = jnp.dot(wbc_ref[...], x2, preferred_element_type=jnp.float32)   # (2CH, W)
    b3 = bc2[:CH].reshape(C, H, W)
    c3 = bc2[CH:].reshape(C, H, W)

    # ---- convD (channel mixing of img) ----
    d2 = jnp.dot(wd_ref[...], img2, preferred_element_type=jnp.float32)   # (CH, W)
    d3 = d2.reshape(C, H, W)

    # ---- per-channel spatial matmul + softmax over rows (torch dim=2) ----
    s = jnp.einsum('chw,cwk->chk', b3, c3,
                   preferred_element_type=jnp.float32)                    # (C, H, W)
    m = jnp.max(s, axis=1, keepdims=True)                                  # (C, 1, W)
    e = jnp.exp(s - m)
    S = e * pl.reciprocal(jnp.sum(e, axis=1, keepdims=True), approx=True)  # (C, H, W)

    # ---- channel mean / variance ----
    flow_mean = jnp.mean(S, axis=0, keepdims=True)                         # (1, H, W)
    var = jnp.sum((S - flow_mean) ** 2, axis=0)                            # (H, W)

    # ---- softmax_normalization over the flattened H*W map ----
    vm = jnp.max(var, axis=(0, 1), keepdims=True)
    ve = jnp.exp(var - vm)
    vnorm = ve * pl.reciprocal(jnp.sum(ve, axis=(0, 1), keepdims=True), approx=True)
    scale = jnp.exp(vnorm)                                                 # (H, W)

    # ---- E = D @ (exp(var) * x); out = gamma * E + img ----
    z3 = scale[None, :, :] * x3                                            # (C, H, W)
    e3 = jnp.einsum('chw,cwk->chk', d3, z3,
                    preferred_element_type=jnp.float32)                    # (C, H, W)
    out_ref[0] = (gamma * e3 + img3).astype(out_ref.dtype)                 # single store


def fusion_pallas(x, img, wB, wC, wD, gamma):
    Bn, C, H, W = x.shape
    assert H == W, "torch.matmul(B, C) with (h, w) x (h, w) requires H == W"
    CH = C * H

    # Weight preprocessing (wrapper-side, outside the kernel, negligible cost):
    # fold the 1x1 conv into a Kronecker-expanded matrix so the in-kernel
    # channel mixing is a plain 2-D MXU matmul on the (C*H, W) slab.
    eye_h = jnp.eye(H, dtype=jnp.float32)
    wbc_kron = jnp.kron(jnp.concatenate([wB, wC], axis=0).astype(jnp.float32),
                        eye_h)                                   # (2*C*H, C*H)
    wd_kron = jnp.kron(wD.astype(jnp.float32), eye_h)            # (C*H, C*H)

    tile_spec = pl.BlockSpec((1, C, H, W), lambda b: (b, 0, 0, 0))
    wbc_spec = pl.BlockSpec((2 * CH, CH), lambda b: (0, 0))      # resident in VMEM
    wd_spec = pl.BlockSpec((CH, CH), lambda b: (0, 0))           # resident in VMEM
    smem_spec = pl.BlockSpec(memory_space=pltpu.MemorySpace.SMEM)

    return pl.pallas_call(
        fusion_kernel,
        out_shape=jax.ShapeDtypeStruct((Bn, C, H, W), x.dtype),
        grid_spec=pltpu.PrefetchScalarGridSpec(
            num_scalar_prefetch=0,
            grid=(Bn,),
            in_specs=[tile_spec, tile_spec, wbc_spec, wd_spec, smem_spec],
            out_specs=tile_spec,
        ),
        compiler_params=pltpu.CompilerParams(dimension_semantics=("parallel",)),
    )(x, img, wbc_kron, wd_kron, gamma)


def fusion_reference(x, img, wB, wC, wD, gamma):
    """Pure-JAX reference matching the PyTorch forward."""
    b, c, h, w = x.shape
    B = jnp.einsum("oi,bihw->bohw", wB, x)
    C = jnp.einsum("oi,bihw->bohw", wC, x)
    S_pre = jnp.einsum("bchw,bcwk->bchk", B, C)       # torch.matmul(B, C)
    S = jax.nn.softmax(S_pre, axis=2)                 # nn.Softmax(dim=2)
    flow_mean = jnp.mean(S, axis=1, keepdims=True)
    var = jnp.sum((S - flow_mean) ** 2, axis=1, keepdims=True)
    var = jax.nn.softmax(var.reshape(b, 1, -1), axis=-1).reshape(b, 1, h, w)
    D = jnp.einsum("oi,bihw->bohw", wD, img)
    E = jnp.einsum("bchw,bcwk->bchk", D, jnp.exp(var) * x)
    return gamma * E + img


if __name__ == "__main__":
    Bn, C, H, W = 2, 4, 16, 16  # H == W required by the module's matmuls

    key = jax.random.PRNGKey(0)
    kx, kimg, kb, kc, kd = jax.random.split(key, 5)
    x = jax.random.normal(kx, (Bn, C, H, W), dtype=jnp.float32) * 0.5
    img = jax.random.normal(kimg, (Bn, C, H, W), dtype=jnp.float32) * 0.5

    # 1x1 conv weights, shape (out_c, in_c); deterministic synthetic init.
    wB = jax.random.normal(kb, (C, C), dtype=jnp.float32) * 0.3
    wC = jax.random.normal(kc, (C, C), dtype=jnp.float32) * 0.3
    wD = jax.random.normal(kd, (C, C), dtype=jnp.float32) * 0.3
    # PyTorch fills gamma with 0.0; use 0.5 here so the full attention path is exercised.
    gamma = jnp.array([0.5], dtype=jnp.float32)

    out = jax.block_until_ready(fusion_pallas(x, img, wB, wC, wD, gamma))

    ref = fusion_reference(x, img, wB, wC, wD, gamma[0])
    np.testing.assert_allclose(np.asarray(out), np.asarray(ref), rtol=5e-2, atol=5e-2)

    print("KERNEL_OK")
</pallas_src>

<mosaic_0001>
module attributes {stable_mosaic.version = 11 : i64} {
  func.func @fusion_kernel(%arg0: i32, %arg1: memref<1x4x16x16xf32, #tpu.memory_space<vmem>>, %arg2: memref<1x4x16x16xf32, #tpu.memory_space<vmem>>, %arg3: memref<128x64xf32, #tpu.memory_space<vmem>>, %arg4: memref<64x64xf32, #tpu.memory_space<vmem>>, %arg5: memref<1xf32, #tpu.memory_space<smem>>, %arg6: memref<1x4x16x16xf32, #tpu.memory_space<vmem>>) attributes {dimension_semantics = [#tpu.dimension_semantics<parallel>], iteration_bounds = array<i64: 2>, scalar_prefetch = 0 : i64, scratch_operands = 0 : i64, tpu.core_type = #tpu.core_type<tc>, window_params = [{transform_indices = @transform_0, window_bounds = array<i64: 1, 4, 16, 16>}, {transform_indices = @transform_1, window_bounds = array<i64: 1, 4, 16, 16>}, {pipeline_mode = #tpu.pipeline_mode<synchronous>, transform_indices = @transform_2, window_bounds = array<i64: 128, 64>}, {pipeline_mode = #tpu.pipeline_mode<synchronous>, transform_indices = @transform_3, window_bounds = array<i64: 64, 64>}, {transform_indices = @transform_4, window_bounds = array<i64: 1>}, {transform_indices = @transform_5, window_bounds = array<i64: 1, 4, 16, 16>}]} {
    %c0 = arith.constant 0 : index
    %0 = memref.load %arg5[%c0] : memref<1xf32, #tpu.memory_space<smem>>
    %c0_0 = arith.constant 0 : index
    %c0_1 = arith.constant 0 : index
    %c0_2 = arith.constant 0 : index
    %c0_3 = arith.constant 0 : index
    %1 = vector.load %arg1[%c0_0, %c0_1, %c0_2, %c0_3] : memref<1x4x16x16xf32, #tpu.memory_space<vmem>>, vector<1x4x16x16xf32>
    %2 = vector.shape_cast %1 : vector<1x4x16x16xf32> to vector<4x16x16xf32>
    %c0_4 = arith.constant 0 : index
    %c0_5 = arith.constant 0 : index
    %c0_6 = arith.constant 0 : index
    %c0_7 = arith.constant 0 : index
    %3 = vector.load %arg2[%c0_4, %c0_5, %c0_6, %c0_7] : memref<1x4x16x16xf32, #tpu.memory_space<vmem>>, vector<1x4x16x16xf32>
    %4 = vector.shape_cast %3 : vector<1x4x16x16xf32> to vector<4x16x16xf32>
    %5 = vector.shape_cast %2 : vector<4x16x16xf32> to vector<64x16xf32>
    %6 = vector.shape_cast %4 : vector<4x16x16xf32> to vector<64x16xf32>
    %c0_8 = arith.constant 0 : index
    %c0_9 = arith.constant 0 : index
    %7 = vector.load %arg3[%c0_8, %c0_9] : memref<128x64xf32, #tpu.memory_space<vmem>>, vector<128x64xf32>
    %cst = arith.constant dense<0.000000e+00> : vector<128x16xf32>
    %8 = tpu.matmul %7, %5, %cst {dimension_numbers = #tpu.dot_dimension_numbers<[1], [0], [0], [1], [0, 0, 1, 1], [], []>} : vector<128x64xf32>, vector<64x16xf32>, vector<128x16xf32> -> vector<128x16xf32>
    %9 = vector.extract_strided_slice %8 {offsets = [0, 0], sizes = [64, 16], strides = [1, 1]} : vector<128x16xf32> to vector<64x16xf32>
    %10 = vector.shape_cast %9 : vector<64x16xf32> to vector<4x16x16xf32>
    %11 = vector.extract_strided_slice %8 {offsets = [64, 0], sizes = [64, 16], strides = [1, 1]} : vector<128x16xf32> to vector<64x16xf32>
    %12 = vector.shape_cast %11 : vector<64x16xf32> to vector<4x16x16xf32>
    %c0_10 = arith.constant 0 : index
    %c0_11 = arith.constant 0 : index
    %13 = vector.load %arg4[%c0_10, %c0_11] : memref<64x64xf32, #tpu.memory_space<vmem>>, vector<64x64xf32>
    %cst_12 = arith.constant dense<0.000000e+00> : vector<64x16xf32>
    %14 = tpu.matmul %13, %6, %cst_12 {dimension_numbers = #tpu.dot_dimension_numbers<[1], [0], [0], [1], [0, 0, 1, 1], [], []>} : vector<64x64xf32>, vector<64x16xf32>, vector<64x16xf32> -> vector<64x16xf32>
    %15 = vector.shape_cast %14 : vector<64x16xf32> to vector<4x16x16xf32>
    "tpu.trace_start"() <{level = 10 : i32, message = "chw,cwk->chk"}> : () -> ()
    %cst_13 = arith.constant dense<0.000000e+00> : vector<4x16x16xf32>
    %16 = tpu.matmul %10, %12, %cst_13 {dimension_numbers = #tpu.dot_dimension_numbers<[2], [1], [1], [2], [0, 0, 0, 1, 1, 2], [0], [0]>} : vector<4x16x16xf32>, vector<4x16x16xf32>, vector<4x16x16xf32> -> vector<4x16x16xf32>
    "tpu.trace_stop"() : () -> ()
    %cst_14 = arith.constant dense<0xFF800000> : vector<4x16xf32>
    %17 = vector.multi_reduction <maximumf>, %16, %cst_14 [1] : vector<4x16x16xf32> to vector<4x16xf32>
    %18 = vector.shape_cast %17 : vector<4x16xf32> to vector<4x1x16xf32>
    %19 = vector.broadcast %18 : vector<4x1x16xf32> to vector<4x16x16xf32>
    %20 = arith.subf %16, %19 : vector<4x16x16xf32>
    %21 = math.exp %20 : vector<4x16x16xf32>
    %cst_15 = arith.constant dense<0.000000e+00> : vector<4x16xf32>
    %22 = vector.multi_reduction <add>, %21, %cst_15 [1] : vector<4x16x16xf32> to vector<4x16xf32>
    %23 = vector.shape_cast %22 : vector<4x16xf32> to vector<4x1x16xf32>
    %24 = tpu.reciprocal %23 {approx = true} : vector<4x1x16xf32> -> vector<4x1x16xf32>
    %25 = vector.broadcast %24 : vector<4x1x16xf32> to vector<4x16x16xf32>
    %26 = arith.mulf %21, %25 : vector<4x16x16xf32>
    %cst_16 = arith.constant dense<0.000000e+00> : vector<16x16xf32>
    %27 = vector.multi_reduction <add>, %26, %cst_16 [0] : vector<4x16x16xf32> to vector<16x16xf32>
    %28 = vector.shape_cast %27 : vector<16x16xf32> to vector<1x16x16xf32>
    %cst_17 = arith.constant 4.000000e+00 : f32
    %29 = vector.broadcast %cst_17 : f32 to vector<1x16x16xf32>
    %30 = arith.divf %28, %29 : vector<1x16x16xf32>
    %31 = vector.broadcast %30 : vector<1x16x16xf32> to vector<4x16x16xf32>
    %32 = arith.subf %26, %31 : vector<4x16x16xf32>
    %33 = arith.mulf %32, %32 : vector<4x16x16xf32>
    %cst_18 = arith.constant dense<0.000000e+00> : vector<16x16xf32>
    %34 = vector.multi_reduction <add>, %33, %cst_18 [0] : vector<4x16x16xf32> to vector<16x16xf32>
    %35 = vector.shape_cast %34 : vector<16x16xf32> to vector<1x16x16xf32>
    %cst_19 = arith.constant dense<0xFF800000> : vector<1xf32>
    %36 = vector.multi_reduction <maximumf>, %35, %cst_19 [1, 2] : vector<1x16x16xf32> to vector<1xf32>
    %37 = vector.shape_cast %36 : vector<1xf32> to vector<1x1x1xf32>
    %38 = vector.extract %37[0, 0, 0] : f32 from vector<1x1x1xf32>
    %39 = vector.broadcast %38 : f32 to vector<1x1xf32>
    %40 = vector.broadcast %39 : vector<1x1xf32> to vector<16x16xf32>
    %41 = arith.subf %34, %40 : vector<16x16xf32>
    %42 = math.exp %41 : vector<16x16xf32>
    %43 = vector.shape_cast %42 : vector<16x16xf32> to vector<1x16x16xf32>
    %cst_20 = arith.constant dense<0.000000e+00> : vector<1xf32>
    %44 = vector.multi_reduction <add>, %43, %cst_20 [1, 2] : vector<1x16x16xf32> to vector<1xf32>
    %45 = vector.shape_cast %44 : vector<1xf32> to vector<1x1x1xf32>
    %46 = vector.extract %45[0, 0, 0] : f32 from vector<1x1x1xf32>
    %47 = vector.broadcast %46 : f32 to vector<1x1xf32>
    %48 = tpu.reciprocal %47 {approx = true} : vector<1x1xf32> -> vector<1x1xf32>
    %49 = vector.broadcast %48 : vector<1x1xf32> to vector<16x16xf32>
    %50 = arith.mulf %42, %49 : vector<16x16xf32>
    %51 = math.exp %50 : vector<16x16xf32>
    %52 = vector.shape_cast %51 : vector<16x16xf32> to vector<1x16x16xf32>
    %53 = vector.broadcast %52 : vector<1x16x16xf32> to vector<4x16x16xf32>
    %54 = arith.mulf %53, %2 : vector<4x16x16xf32>
    "tpu.trace_start"() <{level = 10 : i32, message = "chw,cwk->chk"}> : () -> ()
    %cst_21 = arith.constant dense<0.000000e+00> : vector<4x16x16xf32>
    %55 = tpu.matmul %15, %54, %cst_21 {dimension_numbers = #tpu.dot_dimension_numbers<[2], [1], [1], [2], [0, 0, 0, 1, 1, 2], [0], [0]>} : vector<4x16x16xf32>, vector<4x16x16xf32>, vector<4x16x16xf32> -> vector<4x16x16xf32>
    "tpu.trace_stop"() : () -> ()
    %56 = vector.broadcast %0 : f32 to vector<4x16x16xf32>
    %57 = arith.mulf %56, %55 : vector<4x16x16xf32>
    %58 = arith.addf %57, %4 : vector<4x16x16xf32>
    %c0_22 = arith.constant 0 : index
    %c0_23 = arith.constant 0 : index
    %c0_24 = arith.constant 0 : index
    %c0_25 = arith.constant 0 : index
    %59 = vector.load %arg6[%c0_22, %c0_23, %c0_24, %c0_25] : memref<1x4x16x16xf32, #tpu.memory_space<vmem>>, vector<1x4x16x16xf32>
    %60 = vector.shape_cast %59 : vector<1x4x16x16xf32> to vector<4x16x16xf32>
    %61 = vector.shape_cast %58 : vector<4x16x16xf32> to vector<1x4x16x16xf32>
    tpu.vector_store %arg6[%c0_22, %c0_23, %c0_24, %c0_25], %61 {strides = array<i32>} : memref<1x4x16x16xf32, #tpu.memory_space<vmem>>, vector<1x4x16x16xf32>,
    return
  }
  func.func @transform_0(%arg0: i32) -> (i32, i32, i32, i32) {
    %c0_i32 = arith.constant 0 : i32
    %c0_i32_0 = arith.constant 0 : i32
    %c0_i32_1 = arith.constant 0 : i32
    %c0_i32_2 = arith.constant 0 : i32
    return %arg0, %c0_i32, %c0_i32_0, %c0_i32_1 : i32, i32, i32, i32
  }
  func.func @transform_1(%arg0: i32) -> (i32, i32, i32, i32) {
    %c0_i32 = arith.constant 0 : i32
    %c0_i32_0 = arith.constant 0 : i32
    %c0_i32_1 = arith.constant 0 : i32
    %c0_i32_2 = arith.constant 0 : i32
    return %arg0, %c0_i32, %c0_i32_0, %c0_i32_1 : i32, i32, i32, i32
  }
  func.func @transform_2(%arg0: i32) -> (i32, i32) {
    %c0_i32 = arith.constant 0 : i32
    %c0_i32_0 = arith.constant 0 : i32
    %c0_i32_1 = arith.constant 0 : i32
    return %c0_i32, %c0_i32_0 : i32, i32
  }
  func.func @transform_3(%arg0: i32) -> (i32, i32) {
    %c0_i32 = arith.constant 0 : i32
    %c0_i32_0 = arith.constant 0 : i32
    %c0_i32_1 = arith.constant 0 : i32
    return %c0_i32, %c0_i32_0 : i32, i32
  }
  func.func @transform_4(%arg0: i32) -> i32 {
    %c0_i32 = arith.constant 0 : i32
    %c0_i32_0 = arith.constant 0 : i32
    return %c0_i32 : i32
  }
  func.func @transform_5(%arg0: i32) -> (i32, i32, i32, i32) {
    %c0_i32 = arith.constant 0 : i32
    %c0_i32_0 = arith.constant 0 : i32
    %c0_i32_1 = arith.constant 0 : i32
    %c0_i32_2 = arith.constant 0 : i32
    return %arg0, %c0_i32, %c0_i32_0, %c0_i32_1 : i32, i32, i32, i32
  }
}

</mosaic_0001>

<llo_original>
// kernel: tpu_custom_call.1
$region0: #{tpu_custom_call.1}
  #allocation0 [shape = 'u32[]', space=smem, size = 0x4, offset = 0x4, fixed_abs, tag = 'smem constant byte address 0x4 - core index']
  #allocation1 [shape = 'u32[144,128]{1,0:T(1,128)}', space=vmem, size = 0x12000, scoped, tag = 'internal scratch']
  #allocation2 [shape = 'f32[1]{0:T(128)S(6)}', space=smem, size = 0x200, scoped, tag = 'scoped memory for tpu_custom_call.1']
  %s0 = inlined_call_operand.vmem [shape: f32[2,4,16,16], index: 0, kind: input, shape index: {}]
  %s1 = inlined_call_operand.hbm [shape: f32[2,4,16,16], index: 1, kind: input, shape index: {}]
  %s2 = inlined_call_operand.vmem [shape: f32[128,64], index: 2, kind: input, shape index: {}]
  %s3 = inlined_call_operand.vmem [shape: f32[64,64], index: 3, kind: input, shape index: {}]
  %s4 = inlined_call_operand.<no memory space> [shape: f32[1], index: 4, kind: input, shape index: {}]
  %s5 = inlined_call_operand.hbm [shape: f32[2,4,16,16], index: 5, kind: output, shape index: {}]
  %s6 = sld [smem:[#allocation0]]
  $region57: #{tpu_custom_call.1} parent=0
    _
  %s8 = ssub.s32 1, %s6
  %s9 = scalar_select 0, %s8, %s6
  %10 = sst [smem:[#allocation2]] %s4
  $region1: #{tpu_custom_call.1} parent=0
    #allocation3 [shape = 'u8[65536]{0}', space=vmem, size = 0x10000, scoped, tag = 'input window, operand 1']
    #allocation4 [shape = 's32[2]{0}', space=sflag, size = 0x8, scoped, tag = 'scoped memory for tpu_custom_call.1']
    #allocation5 [shape = 's32[2]{0}', space=sflag, size = 0x8, scoped, tag = 'scoped memory for tpu_custom_call.1']
    #allocation6 [shape = 'u8[65536]{0}', space=vmem, size = 0x10000, scoped, tag = 'output window, operand 0']
    %11 = vsyncpa [#allocation4], 0
    %s12 = scalar_lea.sflag [#allocation4], 1
    %13 = vsyncpa %s12, 0
    %14 = vsyncpa [#allocation5], 0
    %s15 = scalar_lea.sflag [#allocation5], 1
    %16 = vsyncpa %s15, 0
    loop: start=0, step=1, limit=4
    $region2: #{tpu_custom_call.1} parent=1 // loop_pre_header
      _
    $region3: #{tpu_custom_call.1} parent=1 // loop_header
      %s18 = sphi 0, %s22
      %p19 = scmp.ge.s32.totalorder %s18, 4
      %s28 = sphi 0, %s30
      %s31 = sphi 0, %s28
      %s32 = sphi 0, %s31
      %s48 = sphi 0, %s32
      %s54 = sphi 0, %s56
      %s57 = sphi 0, %s54
      %s58 = sphi 0, %s57
      %s74 = sphi 0, %s58
      %s78 = sphi 0, %s78
      %s80 = sphi 0, %s78
      %s81 = sphi 0, %s80
      %s95 = sphi 0, %s81
      %s99 = sphi 0, %s99
      %s101 = sphi 0, %s99
      %s102 = sphi 0, %s101
      %s116 = sphi 0, %s102
      %s120 = sphi 0, %s120
      %s122 = sphi 0, %s120
      %s123 = sphi 0, %s122
      %s137 = sphi 0, %s123
      %s143 = sphi 0, %s145
      %s146 = sphi 0, %s143
      %s147 = sphi 0, %s146
      %s163 = sphi 0, %s147
    $region4: #{tpu_custom_call.1} parent=1 // loop_header_branch
      %21 = sbr.rel (%p19) target = $region8
    $region5: #{tpu_custom_call.1} parent=1 // loop_body
      %s23 = ssub.s32 %s18, 1
      %s24 = ssub.s32 %s18, 2
      %s25 = sadd.s32 %s18, 1
      %s26 = ssub.s32 %s18, %s25
      %p27 = scmp.eq.s32.totalorder %s26, 0
      %s29 = sadd.s32 %s28, 1
      %s30 = scalar_select %p27, %s28, %s29
      %p33 = pneg %p27
      %p34 = scmp.eq.s32.totalorder %s18, 1
      %p35 = por %p33, %p34
      %p36 = scmp.ne.s32.totalorder %s28, %s31
      %p37 = scmp.eq.s32.totalorder %s18, 0
      %p38 = por %p36, %p37
      %p39 = scmp.ne.s32.totalorder %s28, %s31
      %p40 = scmp.eq.s32.totalorder %s23, 1
      %p41 = por %p39, %p40
      %p42 = scmp.ne.s32.totalorder %s31, %s32
      %p43 = scmp.eq.s32.totalorder %s23, 0
      %p44 = por %p42, %p43
      %p45 = scmp.ne.s32.totalorder %s31, %s32
      %p46 = scmp.eq.s32.totalorder %s24, 1
      %p47 = por %p45, %p46
      %p49 = scmp.ne.s32.totalorder %s32, %s48
      %p50 = scmp.eq.s32.totalorder %s24, 0
      %p51 = por %p49, %p50
      %s52 = ssub.s32 %s18, %s25
      %p53 = scmp.eq.s32.totalorder %s52, 0
      %s55 = sadd.s32 %s54, 1
      %s56 = scalar_select %p53, %s54, %s55
      %p59 = pneg %p53
      %p60 = scmp.eq.s32.totalorder %s18, 1
      %p61 = por %p59, %p60
      %p62 = scmp.ne.s32.totalorder %s54, %s57
      %p63 = scmp.eq.s32.totalorder %s18, 0
      %p64 = por %p62, %p63
      %p65 = scmp.ne.s32.totalorder %s54, %s57
      %p66 = scmp.eq.s32.totalorder %s23, 1
      %p67 = por %p65, %p66
      %p68 = scmp.ne.s32.totalorder %s57, %s58
      %p69 = scmp.eq.s32.totalorder %s23, 0
      %p70 = por %p68, %p69
      %p71 = scmp.ne.s32.totalorder %s57, %s58
      %p72 = scmp.eq.s32.totalorder %s24, 1
      %p73 = por %p71, %p72
      %p75 = scmp.ne.s32.totalorder %s58, %s74
      %p76 = scmp.eq.s32.totalorder %s24, 0
      %p77 = por %p75, %p76
      %s79 = sadd.s32 %s78, 1
      %p82 = scmp.eq.s32.totalorder %s18, 1
      %p83 = scmp.ne.s32.totalorder %s78, %s80
      %p84 = scmp.eq.s32.totalorder %s18, 0
      %p85 = por %p83, %p84
      %p86 = scmp.ne.s32.totalorder %s78, %s80
      %p87 = scmp.eq.s32.totalorder %s23, 1
      %p88 = por %p86, %p87
      %p89 = scmp.ne.s32.totalorder %s80, %s81
      %p90 = scmp.eq.s32.totalorder %s23, 0
      %p91 = por %p89, %p90
      %p92 = scmp.ne.s32.totalorder %s80, %s81
      %p93 = scmp.eq.s32.totalorder %s24, 1
      %p94 = por %p92, %p93
      %p96 = scmp.ne.s32.totalorder %s81, %s95
      %p97 = scmp.eq.s32.totalorder %s24, 0
      %p98 = por %p96, %p97
      %s100 = sadd.s32 %s99, 1
      %p103 = scmp.eq.s32.totalorder %s18, 1
      %p104 = scmp.ne.s32.totalorder %s99, %s101
      %p105 = scmp.eq.s32.totalorder %s18, 0
      %p106 = por %p104, %p105
      %p107 = scmp.ne.s32.totalorder %s99, %s101
      %p108 = scmp.eq.s32.totalorder %s23, 1
      %p109 = por %p107, %p108
      %p110 = scmp.ne.s32.totalorder %s101, %s102
      %p111 = scmp.eq.s32.totalorder %s23, 0
      %p112 = por %p110, %p111
      %p113 = scmp.ne.s32.totalorder %s101, %s102
      %p114 = scmp.eq.s32.totalorder %s24, 1
      %p115 = por %p113, %p114
      %p117 = scmp.ne.s32.totalorder %s102, %s116
      %p118 = scmp.eq.s32.totalorder %s24, 0
      %p119 = por %p117, %p118
      %s121 = sadd.s32 %s120, 1
      %p124 = scmp.eq.s32.totalorder %s18, 1
      %p125 = scmp.ne.s32.totalorder %s120, %s122
      %p126 = scmp.eq.s32.totalorder %s18, 0
      %p127 = por %p125, %p126
      %p128 = scmp.ne.s32.totalorder %s120, %s122
      %p129 = scmp.eq.s32.totalorder %s23, 1
      %p130 = por %p128, %p129
      %p131 = scmp.ne.s32.totalorder %s122, %s123
      %p132 = scmp.eq.s32.totalorder %s23, 0
      %p133 = por %p131, %p132
      %p134 = scmp.ne.s32.totalorder %s122, %s123
      %p135 = scmp.eq.s32.totalorder %s24, 1
      %p136 = por %p134, %p135
      %p138 = scmp.ne.s32.totalorder %s123, %s137
      %p139 = scmp.eq.s32.totalorder %s24, 0
      %p140 = por %p138, %p139
      %s141 = ssub.s32 %s18, %s25
      %p142 = scmp.eq.s32.totalorder %s141, 0
      %s144 = sadd.s32 %s143, 1
      %s145 = scalar_select %p142, %s143, %s144
      %p148 = pneg %p142
      %p149 = scmp.eq.s32.totalorder %s18, 1
      %p150 = por %p148, %p149
      %p151 = scmp.ne.s32.totalorder %s143, %s146
      %p152 = scmp.eq.s32.totalorder %s18, 0
      %p153 = por %p151, %p152
      %p154 = scmp.ne.s32.totalorder %s143, %s146
      %p155 = scmp.eq.s32.totalorder %s23, 1
      %p156 = por %p154, %p155
      %p157 = scmp.ne.s32.totalorder %s146, %s147
      %p158 = scmp.eq.s32.totalorder %s23, 0
      %p159 = por %p157, %p158
      %p160 = scmp.ne.s32.totalorder %s146, %s147
      %p161 = scmp.eq.s32.totalorder %s24, 1
      %p162 = por %p160, %p161
      %p164 = scmp.ne.s32.totalorder %s147, %s163
      %p165 = scmp.eq.s32.totalorder %s24, 0
      %p166 = por %p164, %p165
      %p167 = scmp.le.s32.totalorder 1, %s18
      %p168 = scmp.lt.s32.totalorder %s18, 3
      %p169 = pnand %p167, %p168
      %p170 = pneg %p169
      // Predicated region
      $region9: #{tpu_custom_call.1} parent=5 // pred_check
        _
      $region10: #{tpu_custom_call.1} parent=5 // pred_check_branch
        %172 = sbr.rel (%p169) target = $region12
      $region11: #{tpu_custom_call.1} parent=5 // pred_region
        %s173 = ssub.s32 %s18, 1
        // Predicated region
        $region13: #{tpu_custom_call.1} parent=11 // pred_check
          %p174 = pneg %p91
        $region14: #{tpu_custom_call.1} parent=11 // pred_check_branch
          %176 = sbr.rel (%p174) target = $region16
        $region15: #{tpu_custom_call.1} parent=11 // pred_region
          _
        $region16: #{tpu_custom_call.1} parent=11 // pred_fallthru
          _
        // Predicated region
        $region17: #{tpu_custom_call.1} parent=11 // pred_check
          %p177 = pneg %p112
        $region18: #{tpu_custom_call.1} parent=11 // pred_check_branch
          %179 = sbr.rel (%p177) target = $region20
        $region19: #{tpu_custom_call.1} parent=11 // pred_region
          _
        $region20: #{tpu_custom_call.1} parent=11 // pred_fallthru
          _
        // Predicated region
        $region21: #{tpu_custom_call.1} parent=11 // pred_check
          %p180 = pneg %p133
        $region22: #{tpu_custom_call.1} parent=11 // pred_check_branch
          %182 = sbr.rel (%p180) target = $region24
        $region23: #{tpu_custom_call.1} parent=11 // pred_region
          _
        $region24: #{tpu_custom_call.1} parent=11 // pred_fallthru
          _
      $region12: #{tpu_custom_call.1} parent=5 // pred_fallthru
        _
      %p183 = scmp.lt.s32.totalorder %s18, 2
      // Predicated region
      $region25: #{tpu_custom_call.1} parent=5 // pred_check
        %p184 = pneg %p183
      $region26: #{tpu_custom_call.1} parent=5 // pred_check_branch
        %186 = sbr.rel (%p184) target = $region28
      $region27: #{tpu_custom_call.1} parent=5 // pred_region
        // Predicated region
        $region29: #{tpu_custom_call.1} parent=27 // pred_check
          %p187 = pneg %p38
        $region30: #{tpu_custom_call.1} parent=27 // pred_check_branch
          %189 = sbr.rel (%p187) target = $region32
        $region31: #{tpu_custom_call.1} parent=27 // pred_region
          %p190 = scmp.lt.s32.totalorder %s18, 1
          %s191 = scalar_select %p190, %s18, 1
          %s192 = smul.addr %s191, 8
          %s193 = smul.addr %s192, 8
          %s194 = scalar_lea.vmem %s0, %s193
        $region32: #{tpu_custom_call.1} parent=27 // pred_fallthru
          _
        // Predicated region
        $region33: #{tpu_custom_call.1} parent=27 // pred_check
          %p195 = pneg %p64
        $region34: #{tpu_custom_call.1} parent=27 // pred_check_branch
          %197 = sbr.rel (%p195) target = $region36
        $region35: #{tpu_custom_call.1} parent=27 // pred_region
          %s198 = sand.u32 %s54, 1
          %s199 = scalar_lea.sflag [#allocation4], %s198
          %s200 = sand.u32 %s54, 1
          %s201 = smul.addr %s200, 64
          %s202 = scalar_lea.vmem [#allocation3], %s201
          %s204 = ssub.s32 1024, 1024
          %205 = vsyncadd %s199, %s204
          %s206 = smul.addr %s18, 8
          %s207 = smul.addr %s206, 128
          %s208 = scalar_lea.hbm %s1, %s207
          %s209 = sshll.u32 %s202, 4
          %s210 = int_to_ptr.vmem [resolvable:$true] %s209
          %215 = dma.hbm_to_vmem [thread:$0]  %s208, 1024, %s210, %s199, 128, 128, 8
        $region36: #{tpu_custom_call.1} parent=27 // pred_fallthru
          _
      $region28: #{tpu_custom_call.1} parent=5 // pred_fallthru
        _
      %p216 = scmp.le.s32.totalorder 1, %s18
      %p217 = scmp.lt.s32.totalorder %s18, 3
      %p218 = pnand %p216, %p217
      %p219 = pneg %p218
      // Predicated region
      $region37: #{tpu_custom_call.1} parent=5 // pred_check
        _
      $region38: #{tpu_custom_call.1} parent=5 // pred_check_branch
        %221 = sbr.rel (%p218) target = $region40
      $region39: #{tpu_custom_call.1} parent=5 // pred_region
        %s222 = ssub.s32 %s18, 1
        %s223 = sand.u32 %s57, 1
        %s224 = scalar_lea.sflag [#allocation4], %s223
        %s225 = sand.u32 %s57, 1
        %s226 = smul.addr %s225, 64
        %s227 = scalar_lea.vmem [#allocation3], %s226
        // Predicated region
        $region41: #{tpu_custom_call.1} parent=39 // pred_check
          %p228 = pneg %p70
        $region42: #{tpu_custom_call.1} parent=39 // pred_check_branch
          %230 = sbr.rel (%p228) target = $region44
        $region43: #{tpu_custom_call.1} parent=39 // pred_region
          %231 = dma.done %s224, 1024
        $region44: #{tpu_custom_call.1} parent=39 // pred_fallthru
          _
        %p232 = scmp.lt.s32.totalorder %s23, 1
        %s233 = scalar_select %p232, %s23, 1
        %s234 = smul.addr %s233, 8
        %s235 = smul.addr %s234, 8
        %s236 = scalar_lea.vmem %s0, %s235
        %p237 = pneg %p44
        %p238 = pneg %p41
        %s239 = sand.u32 %s57, 1
        %s240 = scalar_lea.sflag [#allocation4], %s239
        %s241 = sand.u32 %s57, 1
        %s242 = smul.addr %s241, 64
        %s243 = scalar_lea.vmem [#allocation3], %s242
        %p244 = pneg %p70
        %p245 = pneg %p67
        %p246 = pneg %p91
        %p247 = pneg %p88
        %p248 = pneg %p112
        %p249 = pneg %p109
        %p250 = pneg %p133
        %p251 = pneg %p130
        %p252 = pneg %p159
        %p253 = pneg %p156
        %s254 = sand.u32 %s146, 1
        %s255 = scalar_lea.sflag [#allocation5], %s254
        %s256 = sand.u32 %s146, 1
        %s257 = smul.addr %s256, 64
        %s258 = scalar_lea.vmem [#allocation6], %s257
        %p259 = scmp.lt.s32.totalorder %s23, 1
        %s260 = scalar_select %p259, %s23, 1
        %s261 = smul.addr %s260, 8
        %s262 = smul.addr %s261, 8
        %s263 = scalar_lea.vmem %s0, %s262
        %s264 = sld [smem:[#allocation2]]
        %v265 = vld [vmem:[%s263] sm:$0xff]
        %v266 = vld [vmem:[%s263 + $0x8] sm:$0xff]
        %v267 = vld [vmem:[%s263 + $0x10] sm:$0xff]
        %v268 = vld [vmem:[%s263 + $0x18] sm:$0xff]
        %v269 = vld [vmem:[%s263 + $0x20] sm:$0xff]
        %v270 = vld [vmem:[%s263 + $0x28] sm:$0xff]
        %v271 = vld [vmem:[%s263 + $0x30] sm:$0xff]
        %v272 = vld [vmem:[%s263 + $0x38] sm:$0xff]
        %v273 = vld [vmem:[%s227] sm:$0xff]
        %v274 = vld [vmem:[%s227 + $0x8] sm:$0xff]
        %v275 = vld [vmem:[%s227 + $0x10] sm:$0xff]
        %v276 = vld [vmem:[%s227 + $0x18] sm:$0xff]
        %v277 = vld [vmem:[%s227 + $0x20] sm:$0xff]
        %v278 = vld [vmem:[%s227 + $0x28] sm:$0xff]
        %v279 = vld [vmem:[%s227 + $0x30] sm:$0xff]
        %v280 = vld [vmem:[%s227 + $0x38] sm:$0xff]
        %v281 = vld [vmem:[%s2] sm:$0xff]
        %v282 = vld [vmem:[%s2 + $0x8] sm:$0xff]
        %v283 = vld [vmem:[%s2 + $0x10] sm:$0xff]
        %v284 = vld [vmem:[%s2 + $0x18] sm:$0xff]
        %v285 = vld [vmem:[%s2 + $0x20] sm:$0xff]
        %v286 = vld [vmem:[%s2 + $0x28] sm:$0xff]
        %v287 = vld [vmem:[%s2 + $0x30] sm:$0xff]
        %v288 = vld [vmem:[%s2 + $0x38] sm:$0xff]
        %v289 = vld [vmem:[%s2 + $0x40] sm:$0xff]
        %v290 = vld [vmem:[%s2 + $0x48] sm:$0xff]
        %v291 = vld [vmem:[%s2 + $0x50] sm:$0xff]
        %v292 = vld [vmem:[%s2 + $0x58] sm:$0xff]
        %v293 = vld [vmem:[%s2 + $0x60] sm:$0xff]
        %v294 = vld [vmem:[%s2 + $0x68] sm:$0xff]
        %v295 = vld [vmem:[%s2 + $0x70] sm:$0xff]
        %v296 = vld [vmem:[%s2 + $0x78] sm:$0xff]
        %vm297 = vcmask 523264
        %v299 = vsel %vm297, %v281, 0
        %v302 = vsel %vm297, %v282, 0
        %v305 = vsel %vm297, %v283, 0
        %v308 = vsel %vm297, %v284, 0
        %v311 = vsel %vm297, %v285, 0
        %v314 = vsel %vm297, %v286, 0
        %v317 = vsel %vm297, %v287, 0
        %v320 = vsel %vm297, %v288, 0
        %v323 = vsel %vm297, %v289, 0
        %v326 = vsel %vm297, %v290, 0
        %v329 = vsel %vm297, %v291, 0
        %v332 = vsel %vm297, %v292, 0
        %v335 = vsel %vm297, %v293, 0
        %v338 = vsel %vm297, %v294, 0
        %v341 = vsel %vm297, %v295, 0
        %v344 = vsel %vm297, %v296, 0
        %346 = vmatprep.subr.mxu0 0.0
        %347 = vmatpush1.msra.mxu0 %v265
        %348 = vmatprep.subr.mxu0 0.0
        %349 = vmatpush1.msra.mxu0 %v266
        %350 = vmatprep.subr.mxu0 0.0
        %351 = vmatpush1.msra.mxu0 %v267
        %352 = vmatprep.subr.mxu0 0.0
        %353 = vmatpush1.msra.mxu0 %v268
        %354 = vmatprep.subr.mxu0 0.0
        %355 = vmatpush1.msra.mxu0 %v269
        %356 = vmatprep.subr.mxu0 0.0
        %357 = vmatpush1.msra.mxu0 %v270
        %358 = vmatprep.subr.mxu0 0.0
        %359 = vmatpush1.msra.mxu0 %v271
        %360 = vmatprep.subr.mxu0 0.0
        %361 = vmatpush1.msra.mxu0 %v272
        %362 = vmatprep.subr.mxu0 0.0
        %363 = vmatpush1.msra.mxu0 0.0
        %364 = vmatprep.subr.mxu0 0.0
        %365 = vmatpush1.msra.mxu0 0.0
        %366 = vmatprep.subr.mxu0 0.0
        %367 = vmatpush1.msra.mxu0 0.0
        %368 = vmatprep.subr.mxu0 0.0
        %369 = vmatpush1.msra.mxu0 0.0
        %370 = vmatprep.subr.mxu0 0.0
        %371 = vmatpush1.msra.mxu0 0.0
        %372 = vmatprep.subr.mxu0 0.0
        %373 = vmatpush1.msra.mxu0 0.0
        %374 = vmatprep.subr.mxu0 0.0
        %375 = vmatpush1.msra.mxu0 0.0
        %376 = vmatprep.subr.mxu0 0.0
        %377 = vmatpush1.msra.mxu0 0.0
        %378 = vmatprep.subr.mxu0 0.0
        %379 = vmatpush1.msra.mxu0 0.0
        %380 = vmatprep.subr.mxu0 0.0
        %381 = vmatpush1.msra.mxu0 0.0
        %382 = vmatprep.subr.mxu0 0.0
        %383 = vmatpush1.msra.mxu0 0.0
        %384 = vmatprep.subr.mxu0 0.0
        %385 = vmatpush1.msra.mxu0 0.0
        %386 = vmatprep.subr.mxu0 0.0
        %387 = vmatpush1.msra.mxu0 0.0
        %388 = vmatprep.subr.mxu0 0.0
        %389 = vmatpush1.msra.mxu0 0.0
        %390 = vmatprep.subr.mxu0 0.0
        %391 = vmatpush1.msra.mxu0 0.0
        %392 = vmatprep.subr.mxu0 0.0
        %393 = vmatpush1.msra.mxu0 0.0
        %394 = vmatprep.subr.mxu0 0.0
        %395 = vmatpush1.msra.mxu0 0.0
        %396 = vmatprep.subr.mxu0 0.0
        %397 = vmatpush1.msra.mxu0 0.0
        %398 = vmatprep.subr.mxu0 0.0
        %399 = vmatpush1.msra.mxu0 0.0
        %400 = vmatprep.subr.mxu0 0.0
        %401 = vmatpush1.msra.mxu0 0.0
        %402 = vmatprep.subr.mxu0 0.0
        %403 = vmatpush1.msra.mxu0 0.0
        %404 = vmatprep.subr.mxu0 0.0
        %405 = vmatpush1.msra.mxu0 0.0
        %406 = vmatprep.subr.mxu0 0.0
        %407 = vmatpush1.msra.mxu0 0.0
        %408 = vmatprep.subr.mxu0 0.0
        %409 = vmatpush1.msra.mxu0 0.0
        %410 = vmatprep.mubr.f32.mxu0 0.0
        %411 = vmatmul.mubr.f32.gmra.mrb[0].mxu0 %v299
        %v412 = vpop.f32.mrb[0].mxu0
        %v413 = vadd.f32 0.0, %v412
        %v414 = vpop.f32.mrb[0].mxu0
        %415 = vmatprep.mubr.f32.mxu0 0.0
        %416 = vmatmul.mubr.f32.gmra.mrb[0].mxu0 %v302
        %v417 = vpop.f32.mrb[0].mxu0
        %v418 = vadd.f32 0.0, %v417
        %v419 = vpop.f32.mrb[0].mxu0
        %420 = vmatprep.mubr.f32.mxu0 0.0
        %421 = vmatmul.mubr.f32.gmra.mrb[0].mxu0 %v305
        %v422 = vpop.f32.mrb[0].mxu0
        %v423 = vadd.f32 0.0, %v422
        %v424 = vpop.f32.mrb[0].mxu0
        %425 = vmatprep.mubr.f32.mxu0 0.0
        %426 = vmatmul.mubr.f32.gmra.mrb[0].mxu0 %v308
        %v427 = vpop.f32.mrb[0].mxu0
        %v428 = vadd.f32 0.0, %v427
        %v429 = vpop.f32.mrb[0].mxu0
        %430 = vmatprep.mubr.f32.mxu0 0.0
        %431 = vmatmul.mubr.f32.gmra.mrb[0].mxu0 %v311
        %v432 = vpop.f32.mrb[0].mxu0
        %v433 = vadd.f32 0.0, %v432
        %v434 = vpop.f32.mrb[0].mxu0
        %435 = vmatprep.mubr.f32.mxu0 0.0
        %436 = vmatmul.mubr.f32.gmra.mrb[0].mxu0 %v314
        %v437 = vpop.f32.mrb[0].mxu0
        %v438 = vadd.f32 0.0, %v437
        %v439 = vpop.f32.mrb[0].mxu0
        %440 = vmatprep.mubr.f32.mxu0 0.0
        %441 = vmatmul.mubr.f32.gmra.mrb[0].mxu0 %v317
        %v442 = vpop.f32.mrb[0].mxu0
        %v443 = vadd.f32 0.0, %v442
        %v444 = vpop.f32.mrb[0].mxu0
        %445 = vmatprep.mubr.f32.mxu0 0.0
        %446 = vmatmul.mubr.f32.gmra.mrb[0].mxu0 %v320
        %v447 = vpop.f32.mrb[0].mxu0
        %v448 = vadd.f32 0.0, %v447
        %v449 = vpop.f32.mrb[0].mxu0
        %450 = vmatprep.mubr.f32.mxu0 0.0
        %451 = vmatmul.mubr.f32.gmra.mrb[0].mxu0 %v323
        %v452 = vpop.f32.mrb[0].mxu0
        %v453 = vadd.f32 0.0, %v452
        %v454 = vpop.f32.mrb[0].mxu0
        %455 = vmatprep.mubr.f32.mxu0 0.0
        %456 = vmatmul.mubr.f32.gmra.mrb[0].mxu0 %v326
        %v457 = vpop.f32.mrb[0].mxu0
        %v458 = vadd.f32 0.0, %v457
        %v459 = vpop.f32.mrb[0].mxu0
        %460 = vmatprep.mubr.f32.mxu0 0.0
        %461 = vmatmul.mubr.f32.gmra.mrb[0].mxu0 %v329
        %v462 = vpop.f32.mrb[0].mxu0
        %v463 = vadd.f32 0.0, %v462
        %v464 = vpop.f32.mrb[0].mxu0
        %465 = vmatprep.mubr.f32.mxu0 0.0
        %466 = vmatmul.mubr.f32.gmra.mrb[0].mxu0 %v332
        %v467 = vpop.f32.mrb[0].mxu0
        %v468 = vadd.f32 0.0, %v467
        %v469 = vpop.f32.mrb[0].mxu0
        %470 = vmatprep.mubr.f32.mxu0 0.0
        %471 = vmatmul.mubr.f32.gmra.mrb[0].mxu0 %v335
        %v472 = vpop.f32.mrb[0].mxu0
        %v473 = vadd.f32 0.0, %v472
        %v474 = vpop.f32.mrb[0].mxu0
        %475 = vmatprep.mubr.f32.mxu0 0.0
        %476 = vmatmul.mubr.f32.gmra.mrb[0].mxu0 %v338
        %v477 = vpop.f32.mrb[0].mxu0
        %v478 = vadd.f32 0.0, %v477
        %v479 = vpop.f32.mrb[0].mxu0
        %480 = vmatprep.mubr.f32.mxu0 0.0
        %481 = vmatmul.mubr.f32.gmra.mrb[0].mxu0 %v341
        %v482 = vpop.f32.mrb[0].mxu0
        %v483 = vadd.f32 0.0, %v482
        %v484 = vpop.f32.mrb[0].mxu0
        %485 = vmatprep.mubr.f32.mxu0 0.0
        %486 = vmatmul.mubr.f32.gmra.mrb[0].mxu0 %v344
        %v487 = vpop.f32.mrb[0].mxu0
        %v488 = vadd.f32 0.0, %v487
        %v489 = vpop.f32.mrb[0].mxu0
        %490 = vdwg.mxu0
        %v491 = vld [vmem:[%s3] sm:$0xff]
        %v492 = vld [vmem:[%s3 + $0x8] sm:$0xff]
        %v493 = vld [vmem:[%s3 + $0x10] sm:$0xff]
        %v494 = vld [vmem:[%s3 + $0x18] sm:$0xff]
        %v495 = vld [vmem:[%s3 + $0x20] sm:$0xff]
        %v496 = vld [vmem:[%s3 + $0x28] sm:$0xff]
        %v497 = vld [vmem:[%s3 + $0x30] sm:$0xff]
        %v498 = vld [vmem:[%s3 + $0x38] sm:$0xff]
        %v500 = vsel %vm297, %v491, 0
        %v503 = vsel %vm297, %v492, 0
        %v506 = vsel %vm297, %v493, 0
        %v509 = vsel %vm297, %v494, 0
        %v512 = vsel %vm297, %v495, 0
        %v515 = vsel %vm297, %v496, 0
        %v518 = vsel %vm297, %v497, 0
        %v521 = vsel %vm297, %v498, 0
        %523 = vmatprep.subr.mxu0 0.0
        %524 = vmatpush1.msra.mxu0 %v273
        %525 = vmatprep.subr.mxu0 0.0
        %526 = vmatpush1.msra.mxu0 %v274
        %527 = vmatprep.subr.mxu0 0.0
        %528 = vmatpush1.msra.mxu0 %v275
        %529 = vmatprep.subr.mxu0 0.0
        %530 = vmatpush1.msra.mxu0 %v276
        %531 = vmatprep.subr.mxu0 0.0
        %532 = vmatpush1.msra.mxu0 %v277
        %533 = vmatprep.subr.mxu0 0.0
        %534 = vmatpush1.msra.mxu0 %v278
        %535 = vmatprep.subr.mxu0 0.0
        %536 = vmatpush1.msra.mxu0 %v279
        %537 = vmatprep.subr.mxu0 0.0
        %538 = vmatpush1.msra.mxu0 %v280
        %539 = vmatprep.subr.mxu0 0.0
        %540 = vmatpush1.msra.mxu0 0.0
        %541 = vmatprep.subr.mxu0 0.0
        %542 = vmatpush1.msra.mxu0 0.0
        %543 = vmatprep.subr.mxu0 0.0
        %544 = vmatpush1.msra.mxu0 0.0
        %545 = vmatprep.subr.mxu0 0.0
        %546 = vmatpush1.msra.mxu0 0.0
        %547 = vmatprep.subr.mxu0 0.0
        %548 = vmatpush1.msra.mxu0 0.0
        %549 = vmatprep.subr.mxu0 0.0
        %550 = vmatpush1.msra.mxu0 0.0
        %551 = vmatprep.subr.mxu0 0.0
        %552 = vmatpush1.msra.mxu0 0.0
        %553 = vmatprep.subr.mxu0 0.0
        %554 = vmatpush1.msra.mxu0 0.0
        %555 = vmatprep.subr.mxu0 0.0
        %556 = vmatpush1.msra.mxu0 0.0
        %557 = vmatprep.subr.mxu0 0.0
        %558 = vmatpush1.msra.mxu0 0.0
        %559 = vmatprep.subr.mxu0 0.0
        %560 = vmatpush1.msra.mxu0 0.0
        %561 = vmatprep.subr.mxu0 0.0
        %562 = vmatpush1.msra.mxu0 0.0
        %563 = vmatprep.subr.mxu0 0.0
        %564 = vmatpush1.msra.mxu0 0.0
        %565 = vmatprep.subr.mxu0 0.0
        %566 = vmatpush1.msra.mxu0 0.0
        %567 = vmatprep.subr.mxu0 0.0
        %568 = vmatpush1.msra.mxu0 0.0
        %569 = vmatprep.subr.mxu0 0.0
        %570 = vmatpush1.msra.mxu0 0.0
        %571 = vmatprep.subr.mxu0 0.0
        %572 = vmatpush1.msra.mxu0 0.0
        %573 = vmatprep.subr.mxu0 0.0
        %574 = vmatpush1.msra.mxu0 0.0
        %575 = vmatprep.subr.mxu0 0.0
        %576 = vmatpush1.msra.mxu0 0.0
        %577 = vmatprep.subr.mxu0 0.0
        %578 = vmatpush1.msra.mxu0 0.0
        %579 = vmatprep.subr.mxu0 0.0
        %580 = vmatpush1.msra.mxu0 0.0
        %581 = vmatprep.subr.mxu0 0.0
        %582 = vmatpush1.msra.mxu0 0.0
        %583 = vmatprep.subr.mxu0 0.0
        %584 = vmatpush1.msra.mxu0 0.0
        %585 = vmatprep.subr.mxu0 0.0
        %586 = vmatpush1.msra.mxu0 0.0
        %587 = vmatprep.mubr.f32.mxu0 0.0
        %588 = vmatmul.mubr.f32.gmra.mrb[0].mxu0 %v500
        %v589 = vpop.f32.mrb[0].mxu0
        %v590 = vadd.f32 0.0, %v589
        %v591 = vpop.f32.mrb[0].mxu0
        %592 = vmatprep.mubr.f32.mxu0 0.0
        %593 = vmatmul.mubr.f32.gmra.mrb[0].mxu0 %v503
        %v594 = vpop.f32.mrb[0].mxu0
        %v595 = vadd.f32 0.0, %v594
        %v596 = vpop.f32.mrb[0].mxu0
        %597 = vmatprep.mubr.f32.mxu0 0.0
        %598 = vmatmul.mubr.f32.gmra.mrb[0].mxu0 %v506
        %v599 = vpop.f32.mrb[0].mxu0
        %v600 = vadd.f32 0.0, %v599
        %v601 = vpop.f32.mrb[0].mxu0
        %602 = vmatprep.mubr.f32.mxu0 0.0
        %603 = vmatmul.mubr.f32.gmra.mrb[0].mxu0 %v509
        %v604 = vpop.f32.mrb[0].mxu0
        %v605 = vadd.f32 0.0, %v604
        %v606 = vpop.f32.mrb[0].mxu0
        %607 = vmatprep.mubr.f32.mxu0 0.0
        %608 = vmatmul.mubr.f32.gmra.mrb[0].mxu0 %v512
        %v609 = vpop.f32.mrb[0].mxu0
        %v610 = vadd.f32 0.0, %v609
        %v611 = vpop.f32.mrb[0].mxu0
        %612 = vmatprep.mubr.f32.mxu0 0.0
        %613 = vmatmul.mubr.f32.gmra.mrb[0].mxu0 %v515
        %v614 = vpop.f32.mrb[0].mxu0
        %v615 = vadd.f32 0.0, %v614
        %v616 = vpop.f32.mrb[0].mxu0
        %617 = vmatprep.mubr.f32.mxu0 0.0
        %618 = vmatmul.mubr.f32.gmra.mrb[0].mxu0 %v518
        %v619 = vpop.f32.mrb[0].mxu0
        %v620 = vadd.f32 0.0, %v619
        %v621 = vpop.f32.mrb[0].mxu0
        %622 = vmatprep.mubr.f32.mxu0 0.0
        %623 = vmatmul.mubr.f32.gmra.mrb[0].mxu0 %v521
        %v624 = vpop.f32.mrb[0].mxu0
        %v625 = vadd.f32 0.0, %v624
        %v626 = vpop.f32.mrb[0].mxu0
        %627 = vdwg.mxu0
        %vm628 = vcmask 130048
        %v630 = vsel %vm628, %v413, 0
        %v633 = vsel %vm628, %v418, 0
        %635 = vmatprep.subr.mxu0 0.0
        %636 = vmatpush1.msra.mxu0 %v453
        %637 = vmatprep.subr.mxu0 0.0
        %638 = vmatpush1.msra.mxu0 %v458
        %639 = vmatprep.subr.mxu0 0.0
        %640 = vmatpush1.msra.mxu0 0.0
        %641 = vmatprep.subr.mxu0 0.0
        %642 = vmatpush1.msra.mxu0 0.0
        %643 = vmatprep.subr.mxu0 0.0
        %644 = vmatpush1.msra.mxu0 0.0
        %645 = vmatprep.subr.mxu0 0.0
        %646 = vmatpush1.msra.mxu0 0.0
        %647 = vmatprep.subr.mxu0 0.0
        %648 = vmatpush1.msra.mxu0 0.0
        %649 = vmatprep.subr.mxu0 0.0
        %650 = vmatpush1.msra.mxu0 0.0
        %651 = vmatprep.subr.mxu0 0.0
        %652 = vmatpush1.msra.mxu0 0.0
        %653 = vmatprep.subr.mxu0 0.0
        %654 = vmatpush1.msra.mxu0 0.0
        %655 = vmatprep.subr.mxu0 0.0
        %656 = vmatpush1.msra.mxu0 0.0
        %657 = vmatprep.subr.mxu0 0.0
        %658 = vmatpush1.msra.mxu0 0.0
        %659 = vmatprep.subr.mxu0 0.0
        %660 = vmatpush1.msra.mxu0 0.0
        %661 = vmatprep.subr.mxu0 0.0
        %662 = vmatpush1.msra.mxu0 0.0
        %663 = vmatprep.subr.mxu0 0.0
        %664 = vmatpush1.msra.mxu0 0.0
        %665 = vmatprep.subr.mxu0 0.0
        %666 = vmatpush1.msra.mxu0 0.0
        %667 = vmatprep.subr.mxu0 0.0
        %668 = vmatpush1.msra.mxu0 0.0
        %669 = vmatprep.subr.mxu0 0.0
        %670 = vmatpush1.msra.mxu0 0.0
        %671 = vmatprep.subr.mxu0 0.0
        %672 = vmatpush1.msra.mxu0 0.0
        %673 = vmatprep.subr.mxu0 0.0
        %674 = vmatpush1.msra.mxu0 0.0
        %675 = vmatprep.subr.mxu0 0.0
        %676 = vmatpush1.msra.mxu0 0.0
        %677 = vmatprep.subr.mxu0 0.0
        %678 = vmatpush1.msra.mxu0 0.0
        %679 = vmatprep.subr.mxu0 0.0
        %680 = vmatpush1.msra.mxu0 0.0
        %681 = vmatprep.subr.mxu0 0.0
        %682 = vmatpush1.msra.mxu0 0.0
        %683 = vmatprep.subr.mxu0 0.0
        %684 = vmatpush1.msra.mxu0 0.0
        %685 = vmatprep.subr.mxu0 0.0
        %686 = vmatpush1.msra.mxu0 0.0
        %687 = vmatprep.subr.mxu0 0.0
        %688 = vmatpush1.msra.mxu0 0.0
        %689 = vmatprep.subr.mxu0 0.0
        %690 = vmatpush1.msra.mxu0 0.0
        %691 = vmatprep.subr.mxu0 0.0
        %692 = vmatpush1.msra.mxu0 0.0
        %693 = vmatprep.subr.mxu0 0.0
        %694 = vmatpush1.msra.mxu0 0.0
        %695 = vmatprep.subr.mxu0 0.0
        %696 = vmatpush1.msra.mxu0 0.0
        %697 = vmatprep.subr.mxu0 0.0
        %698 = vmatpush1.msra.mxu0 0.0
        %699 = vmatprep.mubr.f32.mxu0 0.0
        %700 = vmatmul.mubr.f32.gmra.mrb[0].mxu0 %v630
        %v701 = vpop.f32.mrb[0].mxu0
        %v702 = vadd.f32 0.0, %v701
        %v703 = vpop.f32.mrb[0].mxu0
        %704 = vmatprep.mubr.f32.mxu0 0.0
        %705 = vmatmul.mubr.f32.gmra.mrb[0].mxu0 %v633
        %v706 = vpop.f32.mrb[0].mxu0
        %v707 = vadd.f32 0.0, %v706
        %v708 = vpop.f32.mrb[0].mxu0
        %709 = vdwg.mxu0
        %v711 = vsel %vm628, %v423, 0
        %v714 = vsel %vm628, %v428, 0
        %716 = vmatprep.subr.mxu0 0.0
        %717 = vmatpush1.msra.mxu0 %v463
        %718 = vmatprep.subr.mxu0 0.0
        %719 = vmatpush1.msra.mxu0 %v468
        %720 = vmatprep.subr.mxu0 0.0
        %721 = vmatpush1.msra.mxu0 0.0
        %722 = vmatprep.subr.mxu0 0.0
        %723 = vmatpush1.msra.mxu0 0.0
        %724 = vmatprep.subr.mxu0 0.0
        %725 = vmatpush1.msra.mxu0 0.0
        %726 = vmatprep.subr.mxu0 0.0
        %727 = vmatpush1.msra.mxu0 0.0
        %728 = vmatprep.subr.mxu0 0.0
        %729 = vmatpush1.msra.mxu0 0.0
        %730 = vmatprep.subr.mxu0 0.0
        %731 = vmatpush1.msra.mxu0 0.0
        %732 = vmatprep.subr.mxu0 0.0
        %733 = vmatpush1.msra.mxu0 0.0
        %734 = vmatprep.subr.mxu0 0.0
        %735 = vmatpush1.msra.mxu0 0.0
        %736 = vmatprep.subr.mxu0 0.0
        %737 = vmatpush1.msra.mxu0 0.0
        %738 = vmatprep.subr.mxu0 0.0
        %739 = vmatpush1.msra.mxu0 0.0
        %740 = vmatprep.subr.mxu0 0.0
        %741 = vmatpush1.msra.mxu0 0.0
        %742 = vmatprep.subr.mxu0 0.0
        %743 = vmatpush1.msra.mxu0 0.0
        %744 = vmatprep.subr.mxu0 0.0
        %745 = vmatpush1.msra.mxu0 0.0
        %746 = vmatprep.subr.mxu0 0.0
        %747 = vmatpush1.msra.mxu0 0.0
        %748 = vmatprep.subr.mxu0 0.0
        %749 = vmatpush1.msra.mxu0 0.0
        %750 = vmatprep.subr.mxu0 0.0
        %751 = vmatpush1.msra.mxu0 0.0
        %752 = vmatprep.subr.mxu0 0.0
        %753 = vmatpush1.msra.mxu0 0.0
        %754 = vmatprep.subr.mxu0 0.0
        %755 = vmatpush1.msra.mxu0 0.0
        %756 = vmatprep.subr.mxu0 0.0
        %757 = vmatpush1.msra.mxu0 0.0
        %758 = vmatprep.subr.mxu0 0.0
        %759 = vmatpush1.msra.mxu0 0.0
        %760 = vmatprep.subr.mxu0 0.0
        %761 = vmatpush1.msra.mxu0 0.0
        %762 = vmatprep.subr.mxu0 0.0
        %763 = vmatpush1.msra.mxu0 0.0
        %764 = vmatprep.subr.mxu0 0.0
        %765 = vmatpush1.msra.mxu0 0.0
        %766 = vmatprep.subr.mxu0 0.0
        %767 = vmatpush1.msra.mxu0 0.0
        %768 = vmatprep.subr.mxu0 0.0
        %769 = vmatpush1.msra.mxu0 0.0
        %770 = vmatprep.subr.mxu0 0.0
        %771 = vmatpush1.msra.mxu0 0.0
        %772 = vmatprep.subr.mxu0 0.0
        %773 = vmatpush1.msra.mxu0 0.0
        %774 = vmatprep.subr.mxu0 0.0
        %775 = vmatpush1.msra.mxu0 0.0
        %776 = vmatprep.subr.mxu0 0.0
        %777 = vmatpush1.msra.mxu0 0.0
        %778 = vmatprep.subr.mxu0 0.0
        %779 = vmatpush1.msra.mxu0 0.0
        %780 = vmatprep.mubr.f32.mxu0 0.0
        %781 = vmatmul.mubr.f32.gmra.mrb[0].mxu0 %v711
        %v782 = vpop.f32.mrb[0].mxu0
        %v783 = vadd.f32 0.0, %v782
        %v784 = vpop.f32.mrb[0].mxu0
        %785 = vmatprep.mubr.f32.mxu0 0.0
        %786 = vmatmul.mubr.f32.gmra.mrb[0].mxu0 %v714
        %v787 = vpop.f32.mrb[0].mxu0
        %v788 = vadd.f32 0.0, %v787
        %v789 = vpop.f32.mrb[0].mxu0
        %790 = vdwg.mxu0
        %v792 = vsel %vm628, %v433, 0
        %v795 = vsel %vm628, %v438, 0
        %797 = vmatprep.subr.mxu0 0.0
        %798 = vmatpush1.msra.mxu0 %v473
        %799 = vmatprep.subr.mxu0 0.0
        %800 = vmatpush1.msra.mxu0 %v478
        %801 = vmatprep.subr.mxu0 0.0
        %802 = vmatpush1.msra.mxu0 0.0
        %803 = vmatprep.subr.mxu0 0.0
        %804 = vmatpush1.msra.mxu0 0.0
        %805 = vmatprep.subr.mxu0 0.0
        %806 = vmatpush1.msra.mxu0 0.0
        %807 = vmatprep.subr.mxu0 0.0
        %808 = vmatpush1.msra.mxu0 0.0
        %809 = vmatprep.subr.mxu0 0.0
        %810 = vmatpush1.msra.mxu0 0.0
        %811 = vmatprep.subr.mxu0 0.0
        %812 = vmatpush1.msra.mxu0 0.0
        %813 = vmatprep.subr.mxu0 0.0
        %814 = vmatpush1.msra.mxu0 0.0
        %815 = vmatprep.subr.mxu0 0.0
        %816 = vmatpush1.msra.mxu0 0.0
        %817 = vmatprep.subr.mxu0 0.0
        %818 = vmatpush1.msra.mxu0 0.0
        %819 = vmatprep.subr.mxu0 0.0
        %820 = vmatpush1.msra.mxu0 0.0
        %821 = vmatprep.subr.mxu0 0.0
        %822 = vmatpush1.msra.mxu0 0.0
        %823 = vmatprep.subr.mxu0 0.0
        %824 = vmatpush1.msra.mxu0 0.0
        %825 = vmatprep.subr.mxu0 0.0
        %826 = vmatpush1.msra.mxu0 0.0
        %827 = vmatprep.subr.mxu0 0.0
        %828 = vmatpush1.msra.mxu0 0.0
        %829 = vmatprep.subr.mxu0 0.0
        %830 = vmatpush1.msra.mxu0 0.0
        %831 = vmatprep.subr.mxu0 0.0
        %832 = vmatpush1.msra.mxu0 0.0
        %833 = vmatprep.subr.mxu0 0.0
        %834 = vmatpush1.msra.mxu0 0.0
        %835 = vmatprep.subr.mxu0 0.0
        %836 = vmatpush1.msra.mxu0 0.0
        %837 = vmatprep.subr.mxu0 0.0
        %838 = vmatpush1.msra.mxu0 0.0
        %839 = vmatprep.subr.mxu0 0.0
        %840 = vmatpush1.msra.mxu0 0.0
        %841 = vmatprep.subr.mxu0 0.0
        %842 = vmatpush1.msra.mxu0 0.0
        %843 = vmatprep.subr.mxu0 0.0
        %844 = vmatpush1.msra.mxu0 0.0
        %845 = vmatprep.subr.mxu0 0.0
        %846 = vmatpush1.msra.mxu0 0.0
        %847 = vmatprep.subr.mxu0 0.0
        %848 = vmatpush1.msra.mxu0 0.0
        %849 = vmatprep.subr.mxu0 0.0
        %850 = vmatpush1.msra.mxu0 0.0
        %851 = vmatprep.subr.mxu0 0.0
        %852 = vmatpush1.msra.mxu0 0.0
        %853 = vmatprep.subr.mxu0 0.0
        %854 = vmatpush1.msra.mxu0 0.0
        %855 = vmatprep.subr.mxu0 0.0
        %856 = vmatpush1.msra.mxu0 0.0
        %857 = vmatprep.subr.mxu0 0.0
        %858 = vmatpush1.msra.mxu0 0.0
        %859 = vmatprep.subr.mxu0 0.0
        %860 = vmatpush1.msra.mxu0 0.0
        %861 = vmatprep.mubr.f32.mxu0 0.0
        %862 = vmatmul.mubr.f32.gmra.mrb[0].mxu0 %v792
        %v863 = vpop.f32.mrb[0].mxu0
        %v864 = vadd.f32 0.0, %v863
        %v865 = vpop.f32.mrb[0].mxu0
        %866 = vmatprep.mubr.f32.mxu0 0.0
        %867 = vmatmul.mubr.f32.gmra.mrb[0].mxu0 %v795
        %v868 = vpop.f32.mrb[0].mxu0
        %v869 = vadd.f32 0.0, %v868
        %v870 = vpop.f32.mrb[0].mxu0
        %871 = vdwg.mxu0
        %v873 = vsel %vm628, %v443, 0
        %v876 = vsel %vm628, %v448, 0
        %878 = vmatprep.subr.mxu0 0.0
        %879 = vmatpush1.msra.mxu0 %v483
        %880 = vmatprep.subr.mxu0 0.0
        %881 = vmatpush1.msra.mxu0 %v488
        %882 = vmatprep.subr.mxu0 0.0
        %883 = vmatpush1.msra.mxu0 0.0
        %884 = vmatprep.subr.mxu0 0.0
        %885 = vmatpush1.msra.mxu0 0.0
        %886 = vmatprep.subr.mxu0 0.0
        %887 = vmatpush1.msra.mxu0 0.0
        %888 = vmatprep.subr.mxu0 0.0
        %889 = vmatpush1.msra.mxu0 0.0
        %890 = vmatprep.subr.mxu0 0.0
        %891 = vmatpush1.msra.mxu0 0.0
        %892 = vmatprep.subr.mxu0 0.0
        %893 = vmatpush1.msra.mxu0 0.0
        %894 = vmatprep.subr.mxu0 0.0
        %895 = vmatpush1.msra.mxu0 0.0
        %896 = vmatprep.subr.mxu0 0.0
        %897 = vmatpush1.msra.mxu0 0.0
        %898 = vmatprep.subr.mxu0 0.0
        %899 = vmatpush1.msra.mxu0 0.0
        %900 = vmatprep.subr.mxu0 0.0
        %901 = vmatpush1.msra.mxu0 0.0
        %902 = vmatprep.subr.mxu0 0.0
        %903 = vmatpush1.msra.mxu0 0.0
        %904 = vmatprep.subr.mxu0 0.0
        %905 = vmatpush1.msra.mxu0 0.0
        %906 = vmatprep.subr.mxu0 0.0
        %907 = vmatpush1.msra.mxu0 0.0
        %908 = vmatprep.subr.mxu0 0.0
        %909 = vmatpush1.msra.mxu0 0.0
        %910 = vmatprep.subr.mxu0 0.0
        %911 = vmatpush1.msra.mxu0 0.0
        %912 = vmatprep.subr.mxu0 0.0
        %913 = vmatpush1.msra.mxu0 0.0
        %914 = vmatprep.subr.mxu0 0.0
        %915 = vmatpush1.msra.mxu0 0.0
        %916 = vmatprep.subr.mxu0 0.0
        %917 = vmatpush1.msra.mxu0 0.0
        %918 = vmatprep.subr.mxu0 0.0
        %919 = vmatpush1.msra.mxu0 0.0
        %920 = vmatprep.subr.mxu0 0.0
        %921 = vmatpush1.msra.mxu0 0.0
        %922 = vmatprep.subr.mxu0 0.0
        %923 = vmatpush1.msra.mxu0 0.0
        %924 = vmatprep.subr.mxu0 0.0
        %925 = vmatpush1.msra.mxu0 0.0
        %926 = vmatprep.subr.mxu0 0.0
        %927 = vmatpush1.msra.mxu0 0.0
        %928 = vmatprep.subr.mxu0 0.0
        %929 = vmatpush1.msra.mxu0 0.0
        %930 = vmatprep.subr.mxu0 0.0
        %931 = vmatpush1.msra.mxu0 0.0
        %932 = vmatprep.subr.mxu0 0.0
        %933 = vmatpush1.msra.mxu0 0.0
        %934 = vmatprep.subr.mxu0 0.0
        %935 = vmatpush1.msra.mxu0 0.0
        %936 = vmatprep.subr.mxu0 0.0
        %937 = vmatpush1.msra.mxu0 0.0
        %938 = vmatprep.subr.mxu0 0.0
        %939 = vmatpush1.msra.mxu0 0.0
        %940 = vmatprep.subr.mxu0 0.0
        %941 = vmatpush1.msra.mxu0 0.0
        %942 = vmatprep.mubr.f32.mxu0 0.0
        %943 = vmatmul.mubr.f32.gmra.mrb[0].mxu0 %v873
        %v944 = vpop.f32.mrb[0].mxu0
        %v945 = vadd.f32 0.0, %v944
        %v946 = vpop.f32.mrb[0].mxu0
        %947 = vmatprep.mubr.f32.mxu0 0.0
        %948 = vmatmul.mubr.f32.gmra.mrb[0].mxu0 %v876
        %v949 = vpop.f32.mrb[0].mxu0
        %v950 = vadd.f32 0.0, %v949
        %v951 = vpop.f32.mrb[0].mxu0
        %952 = vdwg.mxu0
        %v953 = vsel %vm628, %v702, -inf
        %v954 = vsel %vm628, %v707, -inf
        %v955 = vmax.f32 %v953, %v954
        %v956 = vrot.slane %v955, 4
        %v957 = vmax.f32 %v955, %v956
        %v958 = vrot.slane %v957, 2
        %v959 = vmax.f32 %v957, %v958
        %v960 = vrot.slane %v959, 1
        %v961 = vmax.f32 %v959, %v960
        %v962 = vsel %vm628, %v783, -inf
        %v963 = vsel %vm628, %v788, -inf
        %v964 = vmax.f32 %v962, %v963
        %v965 = vrot.slane %v964, 4
        %v966 = vmax.f32 %v964, %v965
        %v967 = vrot.slane %v966, 2
        %v968 = vmax.f32 %v966, %v967
        %v969 = vrot.slane %v968, 1
        %v970 = vmax.f32 %v968, %v969
        %v971 = vsel %vm628, %v864, -inf
        %v972 = vsel %vm628, %v869, -inf
        %v973 = vmax.f32 %v971, %v972
        %v974 = vrot.slane %v973, 4
        %v975 = vmax.f32 %v973, %v974
        %v976 = vrot.slane %v975, 2
        %v977 = vmax.f32 %v975, %v976
        %v978 = vrot.slane %v977, 1
        %v979 = vmax.f32 %v977, %v978
        %v980 = vsel %vm628, %v945, -inf
        %v981 = vsel %vm628, %v950, -inf
        %v982 = vmax.f32 %v980, %v981
        %v983 = vrot.slane %v982, 4
        %v984 = vmax.f32 %v982, %v983
        %v985 = vrot.slane %v984, 2
        %v986 = vmax.f32 %v984, %v985
        %v987 = vrot.slane %v986, 1
        %v988 = vmax.f32 %v986, %v987
        %v989 = vsub.f32 %v702, %v961
        %v990 = vsub.f32 %v707, %v961
        %v991 = vsub.f32 %v783, %v970
        %v992 = vsub.f32 %v788, %v970
        %v993 = vsub.f32 %v864, %v979
        %v994 = vsub.f32 %v869, %v979
        %v995 = vsub.f32 %v945, %v988
        %v996 = vsub.f32 %v950, %v988
        %v997 = vmul.f32 %v989, 1.442695
        %v998 = vpow.pop %v997
        %v999 = vmul.f32 %v990, 1.442695
        %v1000 = vpow.pop %v999
        %v1001 = vmul.f32 %v991, 1.442695
        %v1002 = vpow.pop %v1001
        %v1003 = vmul.f32 %v992, 1.442695
        %v1004 = vpow.pop %v1003
        %v1005 = vmul.f32 %v993, 1.442695
        %v1006 = vpow.pop %v1005
        %v1007 = vmul.f32 %v994, 1.442695
        %v1008 = vpow.pop %v1007
        %v1009 = vmul.f32 %v995, 1.442695
        %v1010 = vpow.pop %v1009
        %v1011 = vmul.f32 %v996, 1.442695
        %v1012 = vpow.pop %v1011
        %v1013 = vsel %vm628, %v998, 0.0
        %v1014 = vsel %vm628, %v1000, 0.0
        %v1015 = vadd.f32 %v1013, %v1014
        %v1016 = vrot.slane %v1015, 4
        %v1017 = vadd.f32 %v1015, %v1016
        %v1018 = vrot.slane %v1017, 2
        %v1019 = vadd.f32 %v1017, %v1018
        %v1020 = vrot.slane %v1019, 1
        %v1021 = vadd.f32 %v1019, %v1020
        %v1022 = vsel %vm628, %v1002, 0.0
        %v1023 = vsel %vm628, %v1004, 0.0
        %v1024 = vadd.f32 %v1022, %v1023
        %v1025 = vrot.slane %v1024, 4
        %v1026 = vadd.f32 %v1024, %v1025
        %v1027 = vrot.slane %v1026, 2
        %v1028 = vadd.f32 %v1026, %v1027
        %v1029 = vrot.slane %v1028, 1
        %v1030 = vadd.f32 %v1028, %v1029
        %v1031 = vsel %vm628, %v1006, 0.0
        %v1032 = vsel %vm628, %v1008, 0.0
        %v1033 = vadd.f32 %v1031, %v1032
        %v1034 = vrot.slane %v1033, 4
        %v1035 = vadd.f32 %v1033, %v1034
        %v1036 = vrot.slane %v1035, 2
        %v1037 = vadd.f32 %v1035, %v1036
        %v1038 = vrot.slane %v1037, 1
        %v1039 = vadd.f32 %v1037, %v1038
        %v1040 = vsel %vm628, %v1010, 0.0
        %v1041 = vsel %vm628, %v1012, 0.0
        %v1042 = vadd.f32 %v1040, %v1041
        %v1043 = vrot.slane %v1042, 4
        %v1044 = vadd.f32 %v1042, %v1043
        %v1045 = vrot.slane %v1044, 2
        %v1046 = vadd.f32 %v1044, %v1045
        %v1047 = vrot.slane %v1046, 1
        %v1048 = vadd.f32 %v1046, %v1047
        %v1049 = vrcp.pop %v1021
        %v1050 = vrcp.pop %v1030
        %v1051 = vrcp.pop %v1039
        %v1052 = vrcp.pop %v1048
        %v1053 = vmul.f32 %v998, %v1049
        %v1054 = vmul.f32 %v1000, %v1049
        %v1055 = vmul.f32 %v1002, %v1050
        %v1056 = vmul.f32 %v1004, %v1050
        %v1057 = vmul.f32 %v1006, %v1051
        %v1058 = vmul.f32 %v1008, %v1051
        %v1059 = vmul.f32 %v1010, %v1052
        %v1060 = vmul.f32 %v1012, %v1052
        %v1061 = vsel %vm628, %v1053, 0.0
        %v1062 = vsel %vm628, %v1055, 0.0
        %v1063 = vadd.f32 %v1061, %v1062
        %v1064 = vsel %vm628, %v1057, 0.0
        %v1065 = vadd.f32 %v1063, %v1064
        %v1066 = vsel %vm628, %v1059, 0.0
        %v1067 = vadd.f32 %v1065, %v1066
        %v1068 = vsel %vm628, %v1054, 0.0
        %v1069 = vsel %vm628, %v1056, 0.0
        %v1070 = vadd.f32 %v1068, %v1069
        %v1071 = vsel %vm628, %v1058, 0.0
        %v1072 = vadd.f32 %v1070, %v1071
        %v1073 = vsel %vm628, %v1060, 0.0
        %v1074 = vadd.f32 %v1072, %v1073
        %v1075 = vrcp.pop 4.0
        %v1076 = vmul.f32 %v1067, %v1075
        %v1077 = vmul.f32 %v1074, %v1075
        %v1078 = vsub.f32 %v1053, %v1076
        %v1079 = vsub.f32 %v1054, %v1077
        %v1080 = vsub.f32 %v1055, %v1076
        %v1081 = vsub.f32 %v1056, %v1077
        %v1082 = vsub.f32 %v1057, %v1076
        %v1083 = vsub.f32 %v1058, %v1077
        %v1084 = vsub.f32 %v1059, %v1076
        %v1085 = vsub.f32 %v1060, %v1077
        %v1086 = vmul.f32 %v1078, %v1078
        %v1087 = vmul.f32 %v1079, %v1079
        %v1088 = vmul.f32 %v1080, %v1080
        %v1089 = vmul.f32 %v1081, %v1081
        %v1090 = vmul.f32 %v1082, %v1082
        %v1091 = vmul.f32 %v1083, %v1083
        %v1092 = vmul.f32 %v1084, %v1084
        %v1093 = vmul.f32 %v1085, %v1085
        %v1094 = vsel %vm628, %v1086, 0.0
        %v1095 = vsel %vm628, %v1088, 0.0
        %v1096 = vadd.f32 %v1094, %v1095
        %v1097 = vsel %vm628, %v1090, 0.0
        %v1098 = vadd.f32 %v1096, %v1097
        %v1099 = vsel %vm628, %v1092, 0.0
        %v1100 = vadd.f32 %v1098, %v1099
        %v1101 = vsel %vm628, %v1087, 0.0
        %v1102 = vsel %vm628, %v1089, 0.0
        %v1103 = vadd.f32 %v1101, %v1102
        %v1104 = vsel %vm628, %v1091, 0.0
        %v1105 = vadd.f32 %v1103, %v1104
        %v1106 = vsel %vm628, %v1093, 0.0
        %v1107 = vadd.f32 %v1105, %v1106
        %v1108 = vsel %vm628, %v1100, -inf
        %v1109 = vsel %vm628, %v1107, -inf
        %v1110 = vmax.f32 %v1108, %v1109
        %1111 = vmax.xlane.f32.xlu0 %v1110
        %v1112 = vpop.xlane.xlu0 %1111
        %v1113 = vrot.slane %v1112, 4
        %v1114 = vmax.f32 %v1112, %v1113
        %v1115 = vrot.slane %v1114, 2
        %v1116 = vmax.f32 %v1114, %v1115
        %v1117 = vrot.slane %v1116, 1
        %v1118 = vmax.f32 %v1116, %v1117
        %s1119 = vtos %v1118
        %v1120 = vstv %s1119
        %v1121 = vsub.f32 %v1100, %v1120
        %v1122 = vsub.f32 %v1107, %v1120
        %v1123 = vmul.f32 %v1121, 1.442695
        %v1124 = vpow.pop %v1123
        %v1125 = vmul.f32 %v1122, 1.442695
        %v1126 = vpow.pop %v1125
        %v1127 = vsel %vm628, %v1124, 0.0
        %v1128 = vsel %vm628, %v1126, 0.0
        %v1129 = vadd.f32 %v1127, %v1128
        %1130 = vadd.xlane.f32.xlu0 %v1129
        %v1131 = vpop.xlane.xlu0 %1130
        %v1132 = vrot.slane %v1131, 4
        %v1133 = vadd.f32 %v1131, %v1132
        %v1134 = vrot.slane %v1133, 2
        %v1135 = vadd.f32 %v1133, %v1134
        %v1136 = vrot.slane %v1135, 1
        %v1137 = vadd.f32 %v1135, %v1136
        %s1138 = vtos %v1137
        %v1139 = vstv %s1138
        %v1140 = vrcp.pop %v1139
        %v1141 = vmul.f32 %v1124, %v1140
        %v1142 = vmul.f32 %v1126, %v1140
        %v1143 = vmul.f32 %v1141, 1.442695
        %v1144 = vpow.pop %v1143
        %v1145 = vmul.f32 %v1142, 1.442695
        %v1146 = vpow.pop %v1145
        %v1147 = vmul.f32 %v1144, %v265
        %v1148 = vmul.f32 %v1146, %v266
        %v1149 = vmul.f32 %v1144, %v267
        %v1150 = vmul.f32 %v1146, %v268
        %v1151 = vmul.f32 %v1144, %v269
        %v1152 = vmul.f32 %v1146, %v270
        %v1153 = vmul.f32 %v1144, %v271
        %v1154 = vmul.f32 %v1146, %v272
        %v1156 = vsel %vm628, %v590, 0
        %v1159 = vsel %vm628, %v595, 0
        %1161 = vmatprep.subr.mxu0 0.0
        %1162 = vmatpush1.msra.mxu0 %v1147
        %1163 = vmatprep.subr.mxu0 0.0
        %1164 = vmatpush1.msra.mxu0 %v1148
        %1165 = vmatprep.subr.mxu0 0.0
        %1166 = vmatpush1.msra.mxu0 0.0
        %1167 = vmatprep.subr.mxu0 0.0
        %1168 = vmatpush1.msra.mxu0 0.0
        %1169 = vmatprep.subr.mxu0 0.0
        %1170 = vmatpush1.msra.mxu0 0.0
        %1171 = vmatprep.subr.mxu0 0.0
        %1172 = vmatpush1.msra.mxu0 0.0
        %1173 = vmatprep.subr.mxu0 0.0
        %1174 = vmatpush1.msra.mxu0 0.0
        %1175 = vmatprep.subr.mxu0 0.0
        %1176 = vmatpush1.msra.mxu0 0.0
        %1177 = vmatprep.subr.mxu0 0.0
        %1178 = vmatpush1.msra.mxu0 0.0
        %1179 = vmatprep.subr.mxu0 0.0
        %1180 = vmatpush1.msra.mxu0 0.0
        %1181 = vmatprep.subr.mxu0 0.0
        %1182 = vmatpush1.msra.mxu0 0.0
        %1183 = vmatprep.subr.mxu0 0.0
        %1184 = vmatpush1.msra.mxu0 0.0
        %1185 = vmatprep.subr.mxu0 0.0
        %1186 = vmatpush1.msra.mxu0 0.0
        %1187 = vmatprep.subr.mxu0 0.0
        %1188 = vmatpush1.msra.mxu0 0.0
        %1189 = vmatprep.subr.mxu0 0.0
        %1190 = vmatpush1.msra.mxu0 0.0
        %1191 = vmatprep.subr.mxu0 0.0
        %1192 = vmatpush1.msra.mxu0 0.0
        %1193 = vmatprep.subr.mxu0 0.0
        %1194 = vmatpush1.msra.mxu0 0.0
        %1195 = vmatprep.subr.mxu0 0.0
        %1196 = vmatpush1.msra.mxu0 0.0
        %1197 = vmatprep.subr.mxu0 0.0
        %1198 = vmatpush1.msra.mxu0 0.0
        %1199 = vmatprep.subr.mxu0 0.0
        %1200 = vmatpush1.msra.mxu0 0.0
        %1201 = vmatprep.subr.mxu0 0.0
        %1202 = vmatpush1.msra.mxu0 0.0
        %1203 = vmatprep.subr.mxu0 0.0
        %1204 = vmatpush1.msra.mxu0 0.0
        %1205 = vmatprep.subr.mxu0 0.0
        %1206 = vmatpush1.msra.mxu0 0.0
        %1207 = vmatprep.subr.mxu0 0.0
        %1208 = vmatpush1.msra.mxu0 0.0
        %1209 = vmatprep.subr.mxu0 0.0
        %1210 = vmatpush1.msra.mxu0 0.0
        %1211 = vmatprep.subr.mxu0 0.0
        %1212 = vmatpush1.msra.mxu0 0.0
        %1213 = vmatprep.subr.mxu0 0.0
        %1214 = vmatpush1.msra.mxu0 0.0
        %1215 = vmatprep.subr.mxu0 0.0
        %1216 = vmatpush1.msra.mxu0 0.0
        %1217 = vmatprep.subr.mxu0 0.0
        %1218 = vmatpush1.msra.mxu0 0.0
        %1219 = vmatprep.subr.mxu0 0.0
        %1220 = vmatpush1.msra.mxu0 0.0
        %1221 = vmatprep.subr.mxu0 0.0
        %1222 = vmatpush1.msra.mxu0 0.0
        %1223 = vmatprep.subr.mxu0 0.0
        %1224 = vmatpush1.msra.mxu0 0.0
        %1225 = vmatprep.mubr.f32.mxu0 0.0
        %1226 = vmatmul.mubr.f32.gmra.mrb[0].mxu0 %v1156
        %v1227 = vpop.f32.mrb[0].mxu0
        %v1228 = vadd.f32 0.0, %v1227
        %v1229 = vpop.f32.mrb[0].mxu0
        %1230 = vmatprep.mubr.f32.mxu0 0.0
        %1231 = vmatmul.mubr.f32.gmra.mrb[0].mxu0 %v1159
        %v1232 = vpop.f32.mrb[0].mxu0
        %v1233 = vadd.f32 0.0, %v1232
        %v1234 = vpop.f32.mrb[0].mxu0
        %1235 = vdwg.mxu0
        %v1237 = vsel %vm628, %v600, 0
        %v1240 = vsel %vm628, %v605, 0
        %1242 = vmatprep.subr.mxu0 0.0
        %1243 = vmatpush1.msra.mxu0 %v1149
        %1244 = vmatprep.subr.mxu0 0.0
        %1245 = vmatpush1.msra.mxu0 %v1150
        %1246 = vmatprep.subr.mxu0 0.0
        %1247 = vmatpush1.msra.mxu0 0.0
        %1248 = vmatprep.subr.mxu0 0.0
        %1249 = vmatpush1.msra.mxu0 0.0
        %1250 = vmatprep.subr.mxu0 0.0
        %1251 = vmatpush1.msra.mxu0 0.0
        %1252 = vmatprep.subr.mxu0 0.0
        %1253 = vmatpush1.msra.mxu0 0.0
        %1254 = vmatprep.subr.mxu0 0.0
        %1255 = vmatpush1.msra.mxu0 0.0
        %1256 = vmatprep.subr.mxu0 0.0
        %1257 = vmatpush1.msra.mxu0 0.0
        %1258 = vmatprep.subr.mxu0 0.0
        %1259 = vmatpush1.msra.mxu0 0.0
        %1260 = vmatprep.subr.mxu0 0.0
        %1261 = vmatpush1.msra.mxu0 0.0
        %1262 = vmatprep.subr.mxu0 0.0
        %1263 = vmatpush1.msra.mxu0 0.0
        %1264 = vmatprep.subr.mxu0 0.0
        %1265 = vmatpush1.msra.mxu0 0.0
        %1266 = vmatprep.subr.mxu0 0.0
        %1267 = vmatpush1.msra.mxu0 0.0
        %1268 = vmatprep.subr.mxu0 0.0
        %1269 = vmatpush1.msra.mxu0 0.0
        %1270 = vmatprep.subr.mxu0 0.0
        %1271 = vmatpush1.msra.mxu0 0.0
        %1272 = vmatprep.subr.mxu0 0.0
        %1273 = vmatpush1.msra.mxu0 0.0
        %1274 = vmatprep.subr.mxu0 0.0
        %1275 = vmatpush1.msra.mxu0 0.0
        %1276 = vmatprep.subr.mxu0 0.0
        %1277 = vmatpush1.msra.mxu0 0.0
        %1278 = vmatprep.subr.mxu0 0.0
        %1279 = vmatpush1.msra.mxu0 0.0
        %1280 = vmatprep.subr.mxu0 0.0
        %1281 = vmatpush1.msra.mxu0 0.0
        %1282 = vmatprep.subr.mxu0 0.0
        %1283 = vmatpush1.msra.mxu0 0.0
        %1284 = vmatprep.subr.mxu0 0.0
        %1285 = vmatpush1.msra.mxu0 0.0
        %1286 = vmatprep.subr.mxu0 0.0
        %1287 = vmatpush1.msra.mxu0 0.0
        %1288 = vmatprep.subr.mxu0 0.0
        %1289 = vmatpush1.msra.mxu0 0.0
        %1290 = vmatprep.subr.mxu0 0.0
        %1291 = vmatpush1.msra.mxu0 0.0
        %1292 = vmatprep.subr.mxu0 0.0
        %1293 = vmatpush1.msra.mxu0 0.0
        %1294 = vmatprep.subr.mxu0 0.0
        %1295 = vmatpush1.msra.mxu0 0.0
        %1296 = vmatprep.subr.mxu0 0.0
        %1297 = vmatpush1.msra.mxu0 0.0
        %1298 = vmatprep.subr.mxu0 0.0
        %1299 = vmatpush1.msra.mxu0 0.0
        %1300 = vmatprep.subr.mxu0 0.0
        %1301 = vmatpush1.msra.mxu0 0.0
        %1302 = vmatprep.subr.mxu0 0.0
        %1303 = vmatpush1.msra.mxu0 0.0
        %1304 = vmatprep.subr.mxu0 0.0
        %1305 = vmatpush1.msra.mxu0 0.0
        %1306 = vmatprep.mubr.f32.mxu0 0.0
        %1307 = vmatmul.mubr.f32.gmra.mrb[0].mxu0 %v1237
        %v1308 = vpop.f32.mrb[0].mxu0
        %v1309 = vadd.f32 0.0, %v1308
        %v1310 = vpop.f32.mrb[0].mxu0
        %1311 = vmatprep.mubr.f32.mxu0 0.0
        %1312 = vmatmul.mubr.f32.gmra.mrb[0].mxu0 %v1240
        %v1313 = vpop.f32.mrb[0].mxu0
        %v1314 = vadd.f32 0.0, %v1313
        %v1315 = vpop.f32.mrb[0].mxu0
        %1316 = vdwg.mxu0
        %v1318 = vsel %vm628, %v610, 0
        %v1321 = vsel %vm628, %v615, 0
        %1323 = vmatprep.subr.mxu0 0.0
        %1324 = vmatpush1.msra.mxu0 %v1151
        %1325 = vmatprep.subr.mxu0 0.0
        %1326 = vmatpush1.msra.mxu0 %v1152
        %1327 = vmatprep.subr.mxu0 0.0
        %1328 = vmatpush1.msra.mxu0 0.0
        %1329 = vmatprep.subr.mxu0 0.0
        %1330 = vmatpush1.msra.mxu0 0.0
        %1331 = vmatprep.subr.mxu0 0.0
        %1332 = vmatpush1.msra.mxu0 0.0
        %1333 = vmatprep.subr.mxu0 0.0
        %1334 = vmatpush1.msra.mxu0 0.0
        %1335 = vmatprep.subr.mxu0 0.0
        %1336 = vmatpush1.msra.mxu0 0.0
        %1337 = vmatprep.subr.mxu0 0.0
        %1338 = vmatpush1.msra.mxu0 0.0
        %1339 = vmatprep.subr.mxu0 0.0
        %1340 = vmatpush1.msra.mxu0 0.0
        %1341 = vmatprep.subr.mxu0 0.0
        %1342 = vmatpush1.msra.mxu0 0.0
        %1343 = vmatprep.subr.mxu0 0.0
        %1344 = vmatpush1.msra.mxu0 0.0
        %1345 = vmatprep.subr.mxu0 0.0
        %1346 = vmatpush1.msra.mxu0 0.0
        %1347 = vmatprep.subr.mxu0 0.0
        %1348 = vmatpush1.msra.mxu0 0.0
        %1349 = vmatprep.subr.mxu0 0.0
        %1350 = vmatpush1.msra.mxu0 0.0
        %1351 = vmatprep.subr.mxu0 0.0
        %1352 = vmatpush1.msra.mxu0 0.0
        %1353 = vmatprep.subr.mxu0 0.0
        %1354 = vmatpush1.msra.mxu0 0.0
        %1355 = vmatprep.subr.mxu0 0.0
        %1356 = vmatpush1.msra.mxu0 0.0
        %1357 = vmatprep.subr.mxu0 0.0
        %1358 = vmatpush1.msra.mxu0 0.0
        %1359 = vmatprep.subr.mxu0 0.0
        %1360 = vmatpush1.msra.mxu0 0.0
        %1361 = vmatprep.subr.mxu0 0.0
        %1362 = vmatpush1.msra.mxu0 0.0
        %1363 = vmatprep.subr.mxu0 0.0
        %1364 = vmatpush1.msra.mxu0 0.0
        %1365 = vmatprep.subr.mxu0 0.0
        %1366 = vmatpush1.msra.mxu0 0.0
        %1367 = vmatprep.subr.mxu0 0.0
        %1368 = vmatpush1.msra.mxu0 0.0
        %1369 = vmatprep.subr.mxu0 0.0
        %1370 = vmatpush1.msra.mxu0 0.0
        %1371 = vmatprep.subr.mxu0 0.0
        %1372 = vmatpush1.msra.mxu0 0.0
        %1373 = vmatprep.subr.mxu0 0.0
        %1374 = vmatpush1.msra.mxu0 0.0
        %1375 = vmatprep.subr.mxu0 0.0
        %1376 = vmatpush1.msra.mxu0 0.0
        %1377 = vmatprep.subr.mxu0 0.0
        %1378 = vmatpush1.msra.mxu0 0.0
        %1379 = vmatprep.subr.mxu0 0.0
        %1380 = vmatpush1.msra.mxu0 0.0
        %1381 = vmatprep.subr.mxu0 0.0
        %1382 = vmatpush1.msra.mxu0 0.0
        %1383 = vmatprep.subr.mxu0 0.0
        %1384 = vmatpush1.msra.mxu0 0.0
        %1385 = vmatprep.subr.mxu0 0.0
        %1386 = vmatpush1.msra.mxu0 0.0
        %1387 = vmatprep.mubr.f32.mxu0 0.0
        %1388 = vmatmul.mubr.f32.gmra.mrb[0].mxu0 %v1318
        %v1389 = vpop.f32.mrb[0].mxu0
        %v1390 = vadd.f32 0.0, %v1389
        %v1391 = vpop.f32.mrb[0].mxu0
        %1392 = vmatprep.mubr.f32.mxu0 0.0
        %1393 = vmatmul.mubr.f32.gmra.mrb[0].mxu0 %v1321
        %v1394 = vpop.f32.mrb[0].mxu0
        %v1395 = vadd.f32 0.0, %v1394
        %v1396 = vpop.f32.mrb[0].mxu0
        %1397 = vdwg.mxu0
        %v1399 = vsel %vm628, %v620, 0
        %v1402 = vsel %vm628, %v625, 0
        %1404 = vmatprep.subr.mxu0 0.0
        %1405 = vmatpush1.msra.mxu0 %v1153
        %1406 = vmatprep.subr.mxu0 0.0
        %1407 = vmatpush1.msra.mxu0 %v1154
        %1408 = vmatprep.subr.mxu0 0.0
        %1409 = vmatpush1.msra.mxu0 0.0
        %1410 = vmatprep.subr.mxu0 0.0
        %1411 = vmatpush1.msra.mxu0 0.0
        %1412 = vmatprep.subr.mxu0 0.0
        %1413 = vmatpush1.msra.mxu0 0.0
        %1414 = vmatprep.subr.mxu0 0.0
        %1415 = vmatpush1.msra.mxu0 0.0
        %1416 = vmatprep.subr.mxu0 0.0
        %1417 = vmatpush1.msra.mxu0 0.0
        %1418 = vmatprep.subr.mxu0 0.0
        %1419 = vmatpush1.msra.mxu0 0.0
        %1420 = vmatprep.subr.mxu0 0.0
        %1421 = vmatpush1.msra.mxu0 0.0
        %1422 = vmatprep.subr.mxu0 0.0
        %1423 = vmatpush1.msra.mxu0 0.0
        %1424 = vmatprep.subr.mxu0 0.0
        %1425 = vmatpush1.msra.mxu0 0.0
        %1426 = vmatprep.subr.mxu0 0.0
        %1427 = vmatpush1.msra.mxu0 0.0
        %1428 = vmatprep.subr.mxu0 0.0
        %1429 = vmatpush1.msra.mxu0 0.0
        %1430 = vmatprep.subr.mxu0 0.0
        %1431 = vmatpush1.msra.mxu0 0.0
        %1432 = vmatprep.subr.mxu0 0.0
        %1433 = vmatpush1.msra.mxu0 0.0
        %1434 = vmatprep.subr.mxu0 0.0
        %1435 = vmatpush1.msra.mxu0 0.0
        %1436 = vmatprep.subr.mxu0 0.0
        %1437 = vmatpush1.msra.mxu0 0.0
        %1438 = vmatprep.subr.mxu0 0.0
        %1439 = vmatpush1.msra.mxu0 0.0
        %1440 = vmatprep.subr.mxu0 0.0
        %1441 = vmatpush1.msra.mxu0 0.0
        %1442 = vmatprep.subr.mxu0 0.0
        %1443 = vmatpush1.msra.mxu0 0.0
        %1444 = vmatprep.subr.mxu0 0.0
        %1445 = vmatpush1.msra.mxu0 0.0
        %1446 = vmatprep.subr.mxu0 0.0
        %1447 = vmatpush1.msra.mxu0 0.0
        %1448 = vmatprep.subr.mxu0 0.0
        %1449 = vmatpush1.msra.mxu0 0.0
        %1450 = vmatprep.subr.mxu0 0.0
        %1451 = vmatpush1.msra.mxu0 0.0
        %1452 = vmatprep.subr.mxu0 0.0
        %1453 = vmatpush1.msra.mxu0 0.0
        %1454 = vmatprep.subr.mxu0 0.0
        %1455 = vmatpush1.msra.mxu0 0.0
        %1456 = vmatprep.subr.mxu0 0.0
        %1457 = vmatpush1.msra.mxu0 0.0
        %1458 = vmatprep.subr.mxu0 0.0
        %1459 = vmatpush1.msra.mxu0 0.0
        %1460 = vmatprep.subr.mxu0 0.0
        %1461 = vmatpush1.msra.mxu0 0.0
        %1462 = vmatprep.subr.mxu0 0.0
        %1463 = vmatpush1.msra.mxu0 0.0
        %1464 = vmatprep.subr.mxu0 0.0
        %1465 = vmatpush1.msra.mxu0 0.0
        %1466 = vmatprep.subr.mxu0 0.0
        %1467 = vmatpush1.msra.mxu0 0.0
        %1468 = vmatprep.mubr.f32.mxu0 0.0
        %1469 = vmatmul.mubr.f32.gmra.mrb[0].mxu0 %v1399
        %v1470 = vpop.f32.mrb[0].mxu0
        %v1471 = vadd.f32 0.0, %v1470
        %v1472 = vpop.f32.mrb[0].mxu0
        %1473 = vmatprep.mubr.f32.mxu0 0.0
        %1474 = vmatmul.mubr.f32.gmra.mrb[0].mxu0 %v1402
        %v1475 = vpop.f32.mrb[0].mxu0
        %v1476 = vadd.f32 0.0, %v1475
        %v1477 = vpop.f32.mrb[0].mxu0
        %1478 = vdwg.mxu0
        %v1479 = vstv %s264
        %v1480 = vmul.f32 %v1479, %v1228
        %v1481 = vmul.f32 %v1479, %v1233
        %v1482 = vmul.f32 %v1479, %v1309
        %v1483 = vmul.f32 %v1479, %v1314
        %v1484 = vmul.f32 %v1479, %v1390
        %v1485 = vmul.f32 %v1479, %v1395
        %v1486 = vmul.f32 %v1479, %v1471
        %v1487 = vmul.f32 %v1479, %v1476
        %v1488 = vadd.f32 %v1480, %v273
        %v1489 = vadd.f32 %v1481, %v274
        %v1490 = vadd.f32 %v1482, %v275
        %v1491 = vadd.f32 %v1483, %v276
        %v1492 = vadd.f32 %v1484, %v277
        %v1493 = vadd.f32 %v1485, %v278
        %v1494 = vadd.f32 %v1486, %v279
        %v1495 = vadd.f32 %v1487, %v280
        %1496 = vst.msk [vmem:[%s258] sm:$0xff] %vm628, %v1488
        %1497 = vst.msk [vmem:[%s258 + $0x8] sm:$0xff] %vm628, %v1489
        %1498 = vst.msk [vmem:[%s258 + $0x10] sm:$0xff] %vm628, %v1490
        %1499 = vst.msk [vmem:[%s258 + $0x18] sm:$0xff] %vm628, %v1491
        %1500 = vst.msk [vmem:[%s258 + $0x20] sm:$0xff] %vm628, %v1492
        %1501 = vst.msk [vmem:[%s258 + $0x28] sm:$0xff] %vm628, %v1493
        %1502 = vst.msk [vmem:[%s258 + $0x30] sm:$0xff] %vm628, %v1494
        %1503 = vst.msk [vmem:[%s258 + $0x38] sm:$0xff] %vm628, %v1495
        %s1504 = sand.u32 %s146, 1
        %s1505 = scalar_lea.sflag [#allocation5], %s1504
        %s1506 = sand.u32 %s146, 1
        %s1507 = smul.addr %s1506, 64
        %s1508 = scalar_lea.vmem [#allocation6], %s1507
        // Predicated region
        $region45: #{tpu_custom_call.1} parent=39 // pred_check
          %p1509 = pneg %p156
        $region46: #{tpu_custom_call.1} parent=39 // pred_check_branch
          %1511 = sbr.rel (%p1509) target = $region48
        $region47: #{tpu_custom_call.1} parent=39 // pred_region
          %s1513 = ssub.s32 1024, 1024
          %1514 = vsyncadd %s1505, %s1513
          %s1515 = smul.addr %s23, 8
          %s1516 = smul.addr %s1515, 128
          %s1517 = scalar_lea.hbm %s5, %s1516
          %s1518 = sshll.u32 %s1508, 4
          %s1519 = int_to_ptr.vmem [resolvable:$true] %s1518
          %1524 = dma.vmem_to_hbm [thread:$0]  %s1519, 1024, %s1517, %s1505, 128, 128, 8
        $region48: #{tpu_custom_call.1} parent=39 // pred_fallthru
          _
      $region40: #{tpu_custom_call.1} parent=5 // pred_fallthru
        _
      %p1525 = scmp.le.s32.totalorder 2, %s18
      // Predicated region
      $region49: #{tpu_custom_call.1} parent=5 // pred_check
        %p1526 = pneg %p1525
      $region50: #{tpu_custom_call.1} parent=5 // pred_check_branch
        %1528 = sbr.rel (%p1526) target = $region52
      $region51: #{tpu_custom_call.1} parent=5 // pred_region
        %s1529 = ssub.s32 %s18, 2
        // Predicated region
        $region53: #{tpu_custom_call.1} parent=51 // pred_check
          %p1530 = pneg %p162
        $region54: #{tpu_custom_call.1} parent=51 // pred_check_branch
          %1532 = sbr.rel (%p1530) target = $region56
        $region55: #{tpu_custom_call.1} parent=51 // pred_region
          %s1533 = sand.u32 %s147, 1
          %s1534 = scalar_lea.sflag [#allocation5], %s1533
          %s1535 = sand.u32 %s147, 1
          %s1536 = smul.addr %s1535, 64
          %s1537 = scalar_lea.vmem [#allocation6], %s1536
          %1538 = dma.done %s1534, 1024
        $region56: #{tpu_custom_call.1} parent=51 // pred_fallthru
          _
      $region52: #{tpu_custom_call.1} parent=5 // pred_fallthru
        _
    $region6: #{tpu_custom_call.1} parent=1 // loop_footer
      %s22 = sadd.s32 1, %s18
    $region7: #{tpu_custom_call.1} parent=1 // loop_footer_branch
      %17 = sbr.rel target = $region3
    $region8: #{tpu_custom_call.1} parent=1 // loop_exit
      _
    %1539 = vsyncpa [#allocation4], 1
    %s1540 = scalar_lea.sflag [#allocation4], 1
    %1541 = vsyncpa %s1540, 1
    %1542 = vsyncpa [#allocation5], 1
    %s1543 = scalar_lea.sflag [#allocation5], 1
    %1544 = vsyncpa %s1543, 1

</llo_original>
